<compile_context>
chip_gen: v7x
topology: tpu7x:2x2x1
jax: 0.10.0
libtpu: 0.0.40
codegen_flags: <defaults>
</compile_context>

<pallas_src>
import math

import numpy as np
import jax
import jax.numpy as jnp
from jax.experimental import pallas as pl
from jax.experimental.pallas import tpu as pltpu

P = 8      # portefolio_size
M = 4      # market_data_size
T = 8      # time_horizon
H = 32     # hidden_size (the forward hard-codes .view(-1, 64)  =>  2*H == 64)
NUM_LAYERS = 1
NEG = -1.0e30   # stands in for MaxPool1d's implicit -inf padding

# ---------------------------------------------------------------------------
# Parameter slab layout.  Every weight block starts on an 8-row (sublane tile)
# boundary so the kernel-side views are plain static Ref slices.  All biases
# share one 16-row band ("bias" block), one bias vector per sublane row.
# ---------------------------------------------------------------------------
_W_ENTRIES = (
    ("wpool_dn", (P * T, P)),     # Linear+Conv folded, then shifted right (pool l-1)
    ("wpool_md", (P * T, P)),     # Linear+Conv folded (pool center)
    ("wpool_up", (P * T, P)),     # Linear+Conv folded, then shifted left  (pool l+1)
    ("wsp", (P, H)),
    ("wmp", (M, H)),
    ("w1", (3 * H, H)),
    ("wi", (H, 2 * H)),
    ("wg", (H, 2 * H)),
    ("wo", (H, 2 * H)),
    ("w2", (2 * H, H)),
    ("w3", (H, P)),
    ("w4", (P, 3 * P)),
    ("w5", (3 * P, P)),
    ("w6", (P, 2 * P)),
    ("w7", (2 * P, P)),
    ("bias", (16, 64)),           # all bias rows packed together
)

# name -> (row within the bias block, width)
BIAS_SLOTS = {
    "bpool_dn": (0, P), "bpool_md": (1, P), "bpool_up": (2, P),
    "bsp": (3, H), "bmp": (4, H), "b1": (5, H),
    "bi": (6, 2 * H), "bg": (7, 2 * H), "bo": (8, 2 * H),
    "b2": (9, H), "b3": (10, P), "b4": (11, 3 * P),
    "b5": (12, P), "b6": (13, 2 * P), "b7": (14, P),
}


def _build_layout(entries):
    layout, row, width = {}, 0, 0
    for name, (r, c) in entries:
        layout[name] = (row, r, c)
        row += -(-r // 8) * 8          # keep every block sublane-tile aligned
        width = max(width, c)
    return layout, row, width


W_LAYOUT, SLAB_ROWS, SLAB_WIDTH = _build_layout(_W_ENTRIES)      # (568, 64)
BIAS_ROW0 = W_LAYOUT["bias"][0]

# sum of K*N over all matmuls (per batch row) for the cost estimate
_MATMUL_KN = (3 * (P * T) * P + 2 * P * H + M * H + 3 * H * H + 3 * H * (2 * H)
              + (2 * H) * H + H * P + P * (3 * P) + (3 * P) * P
              + P * (2 * P) + (2 * P) * P)


# ---------------------------------------------------------------------------
# Kernel
# ---------------------------------------------------------------------------
def portefolio_kernel(sp_ref, old_ref, mkt_ref, slab_ref, out_ref):
    f32 = jnp.float32
    dot = lambda a, b: jnp.dot(a, b, preferred_element_type=f32)
    relu = lambda v: jnp.maximum(v, 0.0)

    def w(name):
        r0, nr, nc = W_LAYOUT[name]
        return slab_ref[r0:r0 + nr, 0:nc]

    def bias(name):
        row, width = BIAS_SLOTS[name]
        r = BIAS_ROW0 + row
        return slab_ref[r:r + 1, 0:width]

    xrow = sp_ref[...]          # (B, P*T)  flattened stock predictions
    old = old_ref[...]          # (B, P)
    mkt = mkt_ref[...]          # (B, M)

    # Linear(T,5T) + Conv1d(5T,1,k=3,pad=1) + MaxPool(k=3,pad=1), all channel /
    # spatial mixing folded offline.  Three PARALLEL matmuls from the same LHS
    # (the shifted variants); the -inf pool pads live in the bias rows.
    y_dn = dot(xrow, w("wpool_dn")) + bias("bpool_dn")
    y_md = dot(xrow, w("wpool_md")) + bias("bpool_md")
    y_up = dot(xrow, w("wpool_up")) + bias("bpool_up")
    pooled = jnp.maximum(jnp.maximum(y_dn, y_md), y_up)              # (B, P)

    # Three branch projections.  Dropout(0.1) is identity at inference.
    s_h = relu(dot(pooled, w("wsp")) + bias("bsp"))
    p_h = relu(dot(old, w("wsp")) + bias("bsp"))
    m_h = relu(dot(mkt, w("wmp")) + bias("bmp"))

    # fc1 on the concatenation == sum of three per-branch matmuls (no lane concat).
    r1 = W_LAYOUT["w1"][0]
    x1 = relu(dot(s_h, slab_ref[r1:r1 + H, 0:H])
              + dot(p_h, slab_ref[r1 + H:r1 + 2 * H, 0:H])
              + dot(m_h, slab_ref[r1 + 2 * H:r1 + 3 * H, 0:H])
              + bias("b1"))                                          # (B, H)

    # Single-step, single-layer LSTM with h0 = c0 = 0:
    #   i = sigmoid(x Wi + bi); g = tanh(x Wg + bg); o = sigmoid(x Wo + bo)
    #   c = i * g ; h = o * tanh(c)    (forget gate multiplies c0 == 0)
    i_g = jax.nn.sigmoid(dot(x1, w("wi")) + bias("bi"))
    g_g = jnp.tanh(dot(x1, w("wg")) + bias("bg"))
    o_g = jax.nn.sigmoid(dot(x1, w("wo")) + bias("bo"))
    h_lstm = o_g * jnp.tanh(i_g * g_g)                               # (B, 2H)

    x2 = relu(dot(h_lstm, w("w2")) + bias("b2"))
    x3 = dot(x2, w("w3")) + bias("b3") - old
    x4 = relu(dot(x3, w("w4")) + bias("b4"))
    x5 = relu(dot(x4, w("w5")) + bias("b5")) + old
    x6 = relu(dot(x5, w("w6")) + bias("b6"))
    x7 = dot(x6, w("w7")) + bias("b7")                               # (B, P)

    # softmax over the portefolio axis (lanes; torch dim=0 of the flat vector)
    x7 = x7 - jnp.max(x7, axis=1, keepdims=True)
    e = jnp.exp(x7)
    out_ref[...] = e / jnp.sum(e, axis=1, keepdims=True)


# ---------------------------------------------------------------------------
# Parameters (PyTorch-equivalent parameterization) + offline fold & pack
# ---------------------------------------------------------------------------
def init_params(key):
    def u(k, shape, bound):
        return jax.random.uniform(k, shape, jnp.float32, -bound, bound)

    ki = iter(jax.random.split(key, 64))
    p = {}

    b_ls = 1.0 / math.sqrt(T)
    p["wls"] = u(next(ki), (5 * T, T), b_ls)      # PyTorch (out, in) layout
    p["bls"] = u(next(ki), (5 * T, 1), b_ls)

    b_c = 1.0 / math.sqrt(5 * T * 3)
    p["wc"] = u(next(ki), (3, 5 * T), b_c)        # wc[k, c] = conv.weight[0, c, k]
    p["bc"] = u(next(ki), (1, 1), b_c)

    def linear(fan_in, fan_out):
        b = 1.0 / math.sqrt(fan_in)
        return u(next(ki), (fan_in, fan_out), b), u(next(ki), (1, fan_out), b)

    p["wsp"], p["bsp"] = linear(P, H)             # linear_layer_stocks_portefolio
    p["wmp"], p["bmp"] = linear(M, H)             # linear_layer_market_portefolio
    p["w1"], p["b1"] = linear(3 * H, H)           # fc1

    bl = 1.0 / math.sqrt(2 * H)                   # LSTM(H -> 2H), gates i/g/o
    for g in ("i", "g", "o"):
        p[f"w{g}"] = u(next(ki), (H, 2 * H), bl)                               # W_ih^T
        p[f"b{g}"] = u(next(ki), (1, 2 * H), bl) + u(next(ki), (1, 2 * H), bl)  # b_ih+b_hh

    p["w2"], p["b2"] = linear(2 * H, H)           # fc2
    p["w3"], p["b3"] = linear(H, P)               # fc3
    p["w4"], p["b4"] = linear(P, 3 * P)           # fc4
    p["w5"], p["b5"] = linear(3 * P, P)           # fc5
    p["w6"], p["b6"] = linear(P, 2 * P)           # fc6
    p["w7"], p["b7"] = linear(2 * P, P)           # fc7
    return p


def pack_params(params):
    """Fold + pack everything into a single (SLAB_ROWS, SLAB_WIDTH) f32 slab."""
    pn = {k: np.asarray(jax.device_get(v), np.float64) for k, v in params.items()}

    # Exact offline fold of Linear(T,5T) + Conv1d(5T,1,k=3,pad=1):
    #   vc[k, t]  = sum_c conv_w[0, c, k] * Wls[c, t]
    #   sbias[k]  = sum_c conv_w[0, c, k] * bls[c]
    #   bvec[l]   = bc + sbias[1] + sbias[0]*[l>=1] + sbias[2]*[l<=P-2]
    vc = pn["wc"] @ pn["wls"]                              # (3, T)
    sbias = (pn["wc"] @ pn["bls"]).reshape(3)
    bc = float(pn["bc"].reshape(()))

    bvec = np.zeros((P,), np.float64)
    for l in range(P):
        v = bc + sbias[1]
        if l >= 1:
            v += sbias[0]
        if l <= P - 2:
            v += sbias[2]
        bvec[l] = v

    # Big fold:  y[b, l] = bvec[l] + sum_{m,t} x[b, m*T+t] * Wbig[m*T+t, l]
    # with Wbig[m*T+t, l] = vc[m-l+1, t] for 0 <= m-l+1 <= 2, else 0.
    wbig = np.zeros((P * T, P), np.float64)
    for l in range(P):
        for k in range(3):
            m = l + k - 1
            if 0 <= m < P:
                wbig[m * T:(m + 1) * T, l] = vc[k, :]

    # MaxPool shifts folded offline: y_prev / y_next are just column shifts of
    # Wbig with -inf (NEG) bias at the edges.
    wpool_dn = np.zeros_like(wbig)
    wpool_up = np.zeros_like(wbig)
    bprev = np.full((P,), NEG, np.float64)
    bnext = np.full((P,), NEG, np.float64)
    wpool_dn[:, 1:] = wbig[:, :-1]
    bprev[1:] = bvec[:-1]
    wpool_up[:, :-1] = wbig[:, 1:]
    bnext[:-1] = bvec[1:]

    bias_vals = {
        "bpool_dn": bprev, "bpool_md": bvec, "bpool_up": bnext,
        "bsp": pn["bsp"].reshape(-1), "bmp": pn["bmp"].reshape(-1),
        "b1": pn["b1"].reshape(-1), "bi": pn["bi"].reshape(-1),
        "bg": pn["bg"].reshape(-1), "bo": pn["bo"].reshape(-1),
        "b2": pn["b2"].reshape(-1), "b3": pn["b3"].reshape(-1),
        "b4": pn["b4"].reshape(-1), "b5": pn["b5"].reshape(-1),
        "b6": pn["b6"].reshape(-1), "b7": pn["b7"].reshape(-1),
    }
    bias_blk = np.zeros((16, 64), np.float64)
    for name, (row, width) in BIAS_SLOTS.items():
        v = bias_vals[name]
        assert v.shape == (width,), (name, v.shape, width)
        bias_blk[row, :width] = v

    tensors = {
        "wpool_dn": wpool_dn, "wpool_md": wbig, "wpool_up": wpool_up,
        "wsp": pn["wsp"], "wmp": pn["wmp"], "w1": pn["w1"],
        "wi": pn["wi"], "wg": pn["wg"], "wo": pn["wo"],
        "w2": pn["w2"], "w3": pn["w3"], "w4": pn["w4"],
        "w5": pn["w5"], "w6": pn["w6"], "w7": pn["w7"],
        "bias": bias_blk,
    }

    slab = np.zeros((SLAB_ROWS, SLAB_WIDTH), np.float32)
    for name, (r0, nr, nc) in W_LAYOUT.items():
        a = np.asarray(tensors[name], np.float32)
        assert a.shape == (nr, nc), (name, a.shape, (nr, nc))
        slab[r0:r0 + nr, :nc] = a
    return jnp.asarray(slab)


# ---------------------------------------------------------------------------
# Forward wrappers
# ---------------------------------------------------------------------------
@jax.jit
def model_portefolio_forward_batched(slab, stock_predictions, old_portefolio, market_data):
    """Batched forward: (B,P,T), (B,P), (B,M) -> (B,P); each row == torch forward."""
    f32 = jnp.float32
    b = stock_predictions.shape[0]
    b_pad = -(-b // 8) * 8                        # sublane-tile aligned batch

    def pad(x):
        if x.shape[0] == b_pad:
            return x
        return jnp.pad(x, ((0, b_pad - x.shape[0]),) + ((0, 0),) * (x.ndim - 1))

    sp = pad(stock_predictions.astype(f32)).reshape(b_pad, P * T)
    old = pad(old_portefolio.astype(f32))
    mkt = pad(market_data.astype(f32))

    vmem = pl.BlockSpec(memory_space=pltpu.MemorySpace.VMEM)
    cost = pl.CostEstimate(
        flops=2 * _MATMUL_KN * b_pad,
        transcendentals=(8 * H + P) * b_pad,
        bytes_accessed=4 * (int(slab.size) + int(sp.size) + int(old.size)
                            + int(mkt.size) + b_pad * P),
    )
    out = pl.pallas_call(
        portefolio_kernel,
        out_shape=jax.ShapeDtypeStruct((b_pad, P), f32),
        in_specs=[vmem, vmem, vmem, vmem],
        out_specs=vmem,
        cost_estimate=cost,
    )(sp, old, mkt, slab)
    return out[:b]


def model_portefolio_forward(slab, stock_predictions, old_portefolio, market_data):
    """Single-sample forward matching Model_Portefolio.forward: (P,T),(P,),(M,) -> (P,)."""
    out = model_portefolio_forward_batched(
        slab, stock_predictions[None], old_portefolio[None], market_data[None])
    return out[0]


# ---------------------------------------------------------------------------
# Pure-JAX reference (straight transcription of the PyTorch forward, eval mode)
# ---------------------------------------------------------------------------
def reference_forward(params, stock_predictions, old_portefolio, market_data):
    hp = jax.lax.Precision.HIGHEST
    dot = lambda a, b: jnp.dot(a, b, precision=hp)
    relu = jax.nn.relu
    f32 = jnp.float32

    s = stock_predictions.astype(f32)                                     # (P, T)
    s = dot(s, params["wls"].T) + params["bls"].reshape(1, -1)            # (P, 5T)
    s = s.T                                                               # (5T, P)
    spad = jnp.pad(s, ((0, 0), (1, 1)))                                   # Conv1d zero pad
    y = params["bc"].reshape(())
    for k in range(3):
        y = y + dot(params["wc"][k], spad[:, k:k + P])                    # (P,)
    ypad = jnp.pad(y, (1, 1), constant_values=-jnp.inf)                   # MaxPool -inf pad
    pooled = jnp.maximum(jnp.maximum(ypad[0:P], ypad[1:P + 1]), ypad[2:P + 2])

    s_h = relu(dot(pooled, params["wsp"]) + params["bsp"].reshape(-1))
    p_h = relu(dot(old_portefolio.astype(f32), params["wsp"]) + params["bsp"].reshape(-1))
    m_h = relu(dot(market_data.astype(f32), params["wmp"]) + params["bmp"].reshape(-1))
    x = jnp.concatenate([s_h, p_h, m_h])                                  # dropout == id
    x = relu(dot(x, params["w1"]) + params["b1"].reshape(-1))

    i_g = jax.nn.sigmoid(dot(x, params["wi"]) + params["bi"].reshape(-1))
    g_g = jnp.tanh(dot(x, params["wg"]) + params["bg"].reshape(-1))
    o_g = jax.nn.sigmoid(dot(x, params["wo"]) + params["bo"].reshape(-1))
    x = o_g * jnp.tanh(i_g * g_g)                                         # (2H,)

    x = relu(dot(x, params["w2"]) + params["b2"].reshape(-1))
    x = dot(x, params["w3"]) + params["b3"].reshape(-1) - old_portefolio
    x = relu(dot(x, params["w4"]) + params["b4"].reshape(-1))
    x = relu(dot(x, params["w5"]) + params["b5"].reshape(-1)) + old_portefolio
    x = relu(dot(x, params["w6"]) + params["b6"].reshape(-1))
    x = dot(x, params["w7"]) + params["b7"].reshape(-1)
    return jax.nn.softmax(x)


if __name__ == "__main__":
    key = jax.random.PRNGKey(0)
    kp, k1, k2, k3 = jax.random.split(key, 4)
    params = init_params(kp)
    slab = pack_params(params)            # built once, stays resident on device

    B = 8                                 # batch of independent portefolio forwards
    stock_predictions = jax.random.normal(k1, (B, P, T), jnp.float32)
    old_portefolio = jax.nn.softmax(jax.random.normal(k2, (B, P), jnp.float32), axis=-1)
    market_data = jax.random.normal(k3, (B, M), jnp.float32)

    out = model_portefolio_forward_batched(slab, stock_predictions, old_portefolio, market_data)
    out = jax.block_until_ready(out)

    ref = jax.vmap(lambda s, o, m: reference_forward(params, s, o, m))(
        stock_predictions, old_portefolio, market_data)

    assert out.shape == (B, P)
    assert bool(jnp.all(jnp.isfinite(out)))
    assert float(jnp.max(jnp.abs(jnp.sum(out, axis=1) - 1.0))) < 1e-4   # softmax rows sum to 1
    assert float(jnp.max(jnp.abs(out - ref))) < 1e-3, (out, ref)

    # Single-sample API (original module signature); also exercises the pad path.
    out0 = model_portefolio_forward(slab, stock_predictions[0], old_portefolio[0], market_data[0])
    out0 = jax.block_until_ready(out0)
    assert out0.shape == (P,)
    assert float(jnp.max(jnp.abs(out0 - ref[0]))) < 1e-3

    print("KERNEL_OK")
</pallas_src>

<mosaic_0001>
module attributes {stable_mosaic.version = 11 : i64} {
  func.func @portefolio_kernel(%arg0: memref<8x64xf32, #tpu.memory_space<vmem>>, %arg1: memref<8x8xf32, #tpu.memory_space<vmem>>, %arg2: memref<8x4xf32, #tpu.memory_space<vmem>>, %arg3: memref<568x64xf32, #tpu.memory_space<vmem>>, %arg4: memref<8x8xf32, #tpu.memory_space<vmem>>) attributes {dimension_semantics = [], scalar_prefetch = 0 : i64, scratch_operands = 0 : i64, tpu.core_type = #tpu.core_type<tc>} {
    %c0 = arith.constant 0 : index
    %c0_0 = arith.constant 0 : index
    %0 = vector.load %arg0[%c0, %c0_0] : memref<8x64xf32, #tpu.memory_space<vmem>>, vector<8x64xf32>
    %c0_1 = arith.constant 0 : index
    %c0_2 = arith.constant 0 : index
    %1 = vector.load %arg1[%c0_1, %c0_2] : memref<8x8xf32, #tpu.memory_space<vmem>>, vector<8x8xf32>
    %c0_3 = arith.constant 0 : index
    %c0_4 = arith.constant 0 : index
    %2 = vector.load %arg2[%c0_3, %c0_4] : memref<8x4xf32, #tpu.memory_space<vmem>>, vector<8x4xf32>
    %c0_5 = arith.constant 0 : index
    %c0_6 = arith.constant 0 : index
    %3 = vector.load %arg3[%c0_5, %c0_6] : memref<568x64xf32, #tpu.memory_space<vmem>>, vector<64x8xf32>
    %cst = arith.constant dense<0.000000e+00> : vector<8x8xf32>
    %4 = tpu.matmul %0, %3, %cst {dimension_numbers = #tpu.dot_dimension_numbers<[1], [0], [0], [1], [0, 0, 1, 1], [], []>} : vector<8x64xf32>, vector<64x8xf32>, vector<8x8xf32> -> vector<8x8xf32>
    %c552 = arith.constant 552 : index
    %c0_7 = arith.constant 0 : index
    %5 = vector.load %arg3[%c552, %c0_7] : memref<568x64xf32, #tpu.memory_space<vmem>>, vector<1x8xf32>
    %6 = vector.broadcast %5 : vector<1x8xf32> to vector<8x8xf32>
    %7 = arith.addf %4, %6 : vector<8x8xf32>
    %c64 = arith.constant 64 : index
    %c0_8 = arith.constant 0 : index
    %8 = vector.load %arg3[%c64, %c0_8] : memref<568x64xf32, #tpu.memory_space<vmem>>, vector<64x8xf32>
    %cst_9 = arith.constant dense<0.000000e+00> : vector<8x8xf32>
    %9 = tpu.matmul %0, %8, %cst_9 {dimension_numbers = #tpu.dot_dimension_numbers<[1], [0], [0], [1], [0, 0, 1, 1], [], []>} : vector<8x64xf32>, vector<64x8xf32>, vector<8x8xf32> -> vector<8x8xf32>
    %c553 = arith.constant 553 : index
    %c0_10 = arith.constant 0 : index
    %10 = vector.load %arg3[%c553, %c0_10] : memref<568x64xf32, #tpu.memory_space<vmem>>, vector<1x8xf32>
    %11 = vector.broadcast %10 : vector<1x8xf32> to vector<8x8xf32>
    %12 = arith.addf %9, %11 : vector<8x8xf32>
    %c128 = arith.constant 128 : index
    %c0_11 = arith.constant 0 : index
    %13 = vector.load %arg3[%c128, %c0_11] : memref<568x64xf32, #tpu.memory_space<vmem>>, vector<64x8xf32>
    %cst_12 = arith.constant dense<0.000000e+00> : vector<8x8xf32>
    %14 = tpu.matmul %0, %13, %cst_12 {dimension_numbers = #tpu.dot_dimension_numbers<[1], [0], [0], [1], [0, 0, 1, 1], [], []>} : vector<8x64xf32>, vector<64x8xf32>, vector<8x8xf32> -> vector<8x8xf32>
    %c554 = arith.constant 554 : index
    %c0_13 = arith.constant 0 : index
    %15 = vector.load %arg3[%c554, %c0_13] : memref<568x64xf32, #tpu.memory_space<vmem>>, vector<1x8xf32>
    %16 = vector.broadcast %15 : vector<1x8xf32> to vector<8x8xf32>
    %17 = arith.addf %14, %16 : vector<8x8xf32>
    %18 = arith.maximumf %7, %12 : vector<8x8xf32>
    %19 = arith.maximumf %18, %17 : vector<8x8xf32>
    %c192 = arith.constant 192 : index
    %c0_14 = arith.constant 0 : index
    %20 = vector.load %arg3[%c192, %c0_14] : memref<568x64xf32, #tpu.memory_space<vmem>>, vector<8x32xf32>
    %cst_15 = arith.constant dense<0.000000e+00> : vector<8x32xf32>
    %21 = tpu.matmul %19, %20, %cst_15 {dimension_numbers = #tpu.dot_dimension_numbers<[1], [0], [0], [1], [0, 0, 1, 1], [], []>} : vector<8x8xf32>, vector<8x32xf32>, vector<8x32xf32> -> vector<8x32xf32>
    %c555 = arith.constant 555 : index
    %c0_16 = arith.constant 0 : index
    %22 = vector.load %arg3[%c555, %c0_16] : memref<568x64xf32, #tpu.memory_space<vmem>>, vector<1x32xf32>
    %23 = vector.broadcast %22 : vector<1x32xf32> to vector<8x32xf32>
    %24 = arith.addf %21, %23 : vector<8x32xf32>
    %cst_17 = arith.constant 0.000000e+00 : f32
    %25 = vector.broadcast %cst_17 : f32 to vector<8x32xf32>
    %26 = arith.maximumf %24, %25 : vector<8x32xf32>
    %c192_18 = arith.constant 192 : index
    %c0_19 = arith.constant 0 : index
    %27 = vector.load %arg3[%c192_18, %c0_19] : memref<568x64xf32, #tpu.memory_space<vmem>>, vector<8x32xf32>
    %cst_20 = arith.constant dense<0.000000e+00> : vector<8x32xf32>
    %28 = tpu.matmul %1, %27, %cst_20 {dimension_numbers = #tpu.dot_dimension_numbers<[1], [0], [0], [1], [0, 0, 1, 1], [], []>} : vector<8x8xf32>, vector<8x32xf32>, vector<8x32xf32> -> vector<8x32xf32>
    %c555_21 = arith.constant 555 : index
    %c0_22 = arith.constant 0 : index
    %29 = vector.load %arg3[%c555_21, %c0_22] : memref<568x64xf32, #tpu.memory_space<vmem>>, vector<1x32xf32>
    %30 = vector.broadcast %29 : vector<1x32xf32> to vector<8x32xf32>
    %31 = arith.addf %28, %30 : vector<8x32xf32>
    %cst_23 = arith.constant 0.000000e+00 : f32
    %32 = vector.broadcast %cst_23 : f32 to vector<8x32xf32>
    %33 = arith.maximumf %31, %32 : vector<8x32xf32>
    %c200 = arith.constant 200 : index
    %c0_24 = arith.constant 0 : index
    %34 = vector.load %arg3[%c200, %c0_24] : memref<568x64xf32, #tpu.memory_space<vmem>>, vector<4x32xf32>
    %cst_25 = arith.constant dense<0.000000e+00> : vector<8x32xf32>
    %35 = tpu.matmul %2, %34, %cst_25 {dimension_numbers = #tpu.dot_dimension_numbers<[1], [0], [0], [1], [0, 0, 1, 1], [], []>} : vector<8x4xf32>, vector<4x32xf32>, vector<8x32xf32> -> vector<8x32xf32>
    %c556 = arith.constant 556 : index
    %c0_26 = arith.constant 0 : index
    %36 = vector.load %arg3[%c556, %c0_26] : memref<568x64xf32, #tpu.memory_space<vmem>>, vector<1x32xf32>
    %37 = vector.broadcast %36 : vector<1x32xf32> to vector<8x32xf32>
    %38 = arith.addf %35, %37 : vector<8x32xf32>
    %cst_27 = arith.constant 0.000000e+00 : f32
    %39 = vector.broadcast %cst_27 : f32 to vector<8x32xf32>
    %40 = arith.maximumf %38, %39 : vector<8x32xf32>
    %c208 = arith.constant 208 : index
    %c0_28 = arith.constant 0 : index
    %41 = vector.load %arg3[%c208, %c0_28] : memref<568x64xf32, #tpu.memory_space<vmem>>, vector<32x32xf32>
    %cst_29 = arith.constant dense<0.000000e+00> : vector<8x32xf32>
    %42 = tpu.matmul %26, %41, %cst_29 {dimension_numbers = #tpu.dot_dimension_numbers<[1], [0], [0], [1], [0, 0, 1, 1], [], []>} : vector<8x32xf32>, vector<32x32xf32>, vector<8x32xf32> -> vector<8x32xf32>
    %c240 = arith.constant 240 : index
    %c0_30 = arith.constant 0 : index
    %43 = vector.load %arg3[%c240, %c0_30] : memref<568x64xf32, #tpu.memory_space<vmem>>, vector<32x32xf32>
    %cst_31 = arith.constant dense<0.000000e+00> : vector<8x32xf32>
    %44 = tpu.matmul %33, %43, %cst_31 {dimension_numbers = #tpu.dot_dimension_numbers<[1], [0], [0], [1], [0, 0, 1, 1], [], []>} : vector<8x32xf32>, vector<32x32xf32>, vector<8x32xf32> -> vector<8x32xf32>
    %45 = arith.addf %42, %44 : vector<8x32xf32>
    %c272 = arith.constant 272 : index
    %c0_32 = arith.constant 0 : index
    %46 = vector.load %arg3[%c272, %c0_32] : memref<568x64xf32, #tpu.memory_space<vmem>>, vector<32x32xf32>
    %cst_33 = arith.constant dense<0.000000e+00> : vector<8x32xf32>
    %47 = tpu.matmul %40, %46, %cst_33 {dimension_numbers = #tpu.dot_dimension_numbers<[1], [0], [0], [1], [0, 0, 1, 1], [], []>} : vector<8x32xf32>, vector<32x32xf32>, vector<8x32xf32> -> vector<8x32xf32>
    %48 = arith.addf %45, %47 : vector<8x32xf32>
    %c557 = arith.constant 557 : index
    %c0_34 = arith.constant 0 : index
    %49 = vector.load %arg3[%c557, %c0_34] : memref<568x64xf32, #tpu.memory_space<vmem>>, vector<1x32xf32>
    %50 = vector.broadcast %49 : vector<1x32xf32> to vector<8x32xf32>
    %51 = arith.addf %48, %50 : vector<8x32xf32>
    %cst_35 = arith.constant 0.000000e+00 : f32
    %52 = vector.broadcast %cst_35 : f32 to vector<8x32xf32>
    %53 = arith.maximumf %51, %52 : vector<8x32xf32>
    %c304 = arith.constant 304 : index
    %c0_36 = arith.constant 0 : index
    %54 = vector.load %arg3[%c304, %c0_36] : memref<568x64xf32, #tpu.memory_space<vmem>>, vector<32x64xf32>
    %cst_37 = arith.constant dense<0.000000e+00> : vector<8x64xf32>
    %55 = tpu.matmul %53, %54, %cst_37 {dimension_numbers = #tpu.dot_dimension_numbers<[1], [0], [0], [1], [0, 0, 1, 1], [], []>} : vector<8x32xf32>, vector<32x64xf32>, vector<8x64xf32> -> vector<8x64xf32>
    %c558 = arith.constant 558 : index
    %c0_38 = arith.constant 0 : index
    %56 = vector.load %arg3[%c558, %c0_38] : memref<568x64xf32, #tpu.memory_space<vmem>>, vector<1x64xf32>
    %57 = vector.broadcast %56 : vector<1x64xf32> to vector<8x64xf32>
    %58 = arith.addf %55, %57 : vector<8x64xf32>
    %59 = arith.negf %58 : vector<8x64xf32>
    %60 = math.exp %59 : vector<8x64xf32>
    %cst_39 = arith.constant 1.000000e+00 : f32
    %61 = vector.broadcast %cst_39 : f32 to vector<8x64xf32>
    %62 = arith.addf %61, %60 : vector<8x64xf32>
    %63 = arith.divf %61, %62 : vector<8x64xf32>
    %c336 = arith.constant 336 : index
    %c0_40 = arith.constant 0 : index
    %64 = vector.load %arg3[%c336, %c0_40] : memref<568x64xf32, #tpu.memory_space<vmem>>, vector<32x64xf32>
    %cst_41 = arith.constant dense<0.000000e+00> : vector<8x64xf32>
    %65 = tpu.matmul %53, %64, %cst_41 {dimension_numbers = #tpu.dot_dimension_numbers<[1], [0], [0], [1], [0, 0, 1, 1], [], []>} : vector<8x32xf32>, vector<32x64xf32>, vector<8x64xf32> -> vector<8x64xf32>
    %c559 = arith.constant 559 : index
    %c0_42 = arith.constant 0 : index
    %66 = vector.load %arg3[%c559, %c0_42] : memref<568x64xf32, #tpu.memory_space<vmem>>, vector<1x64xf32>
    %67 = vector.broadcast %66 : vector<1x64xf32> to vector<8x64xf32>
    %68 = arith.addf %65, %67 : vector<8x64xf32>
    %69 = math.tanh %68 : vector<8x64xf32>
    %c368 = arith.constant 368 : index
    %c0_43 = arith.constant 0 : index
    %70 = vector.load %arg3[%c368, %c0_43] : memref<568x64xf32, #tpu.memory_space<vmem>>, vector<32x64xf32>
    %cst_44 = arith.constant dense<0.000000e+00> : vector<8x64xf32>
    %71 = tpu.matmul %53, %70, %cst_44 {dimension_numbers = #tpu.dot_dimension_numbers<[1], [0], [0], [1], [0, 0, 1, 1], [], []>} : vector<8x32xf32>, vector<32x64xf32>, vector<8x64xf32> -> vector<8x64xf32>
    %c560 = arith.constant 560 : index
    %c0_45 = arith.constant 0 : index
    %72 = vector.load %arg3[%c560, %c0_45] : memref<568x64xf32, #tpu.memory_space<vmem>>, vector<1x64xf32>
    %73 = vector.broadcast %72 : vector<1x64xf32> to vector<8x64xf32>
    %74 = arith.addf %71, %73 : vector<8x64xf32>
    %75 = arith.negf %74 : vector<8x64xf32>
    %76 = math.exp %75 : vector<8x64xf32>
    %cst_46 = arith.constant 1.000000e+00 : f32
    %77 = vector.broadcast %cst_46 : f32 to vector<8x64xf32>
    %78 = arith.addf %77, %76 : vector<8x64xf32>
    %79 = arith.divf %77, %78 : vector<8x64xf32>
    %80 = arith.mulf %63, %69 : vector<8x64xf32>
    %81 = math.tanh %80 : vector<8x64xf32>
    %82 = arith.mulf %79, %81 : vector<8x64xf32>
    %c400 = arith.constant 400 : index
    %c0_47 = arith.constant 0 : index
    %83 = vector.load %arg3[%c400, %c0_47] : memref<568x64xf32, #tpu.memory_space<vmem>>, vector<64x32xf32>
    %cst_48 = arith.constant dense<0.000000e+00> : vector<8x32xf32>
    %84 = tpu.matmul %82, %83, %cst_48 {dimension_numbers = #tpu.dot_dimension_numbers<[1], [0], [0], [1], [0, 0, 1, 1], [], []>} : vector<8x64xf32>, vector<64x32xf32>, vector<8x32xf32> -> vector<8x32xf32>
    %c561 = arith.constant 561 : index
    %c0_49 = arith.constant 0 : index
    %85 = vector.load %arg3[%c561, %c0_49] : memref<568x64xf32, #tpu.memory_space<vmem>>, vector<1x32xf32>
    %86 = vector.broadcast %85 : vector<1x32xf32> to vector<8x32xf32>
    %87 = arith.addf %84, %86 : vector<8x32xf32>
    %cst_50 = arith.constant 0.000000e+00 : f32
    %88 = vector.broadcast %cst_50 : f32 to vector<8x32xf32>
    %89 = arith.maximumf %87, %88 : vector<8x32xf32>
    %c464 = arith.constant 464 : index
    %c0_51 = arith.constant 0 : index
    %90 = vector.load %arg3[%c464, %c0_51] : memref<568x64xf32, #tpu.memory_space<vmem>>, vector<32x8xf32>
    %cst_52 = arith.constant dense<0.000000e+00> : vector<8x8xf32>
    %91 = tpu.matmul %89, %90, %cst_52 {dimension_numbers = #tpu.dot_dimension_numbers<[1], [0], [0], [1], [0, 0, 1, 1], [], []>} : vector<8x32xf32>, vector<32x8xf32>, vector<8x8xf32> -> vector<8x8xf32>
    %c562 = arith.constant 562 : index
    %c0_53 = arith.constant 0 : index
    %92 = vector.load %arg3[%c562, %c0_53] : memref<568x64xf32, #tpu.memory_space<vmem>>, vector<1x8xf32>
    %93 = vector.broadcast %92 : vector<1x8xf32> to vector<8x8xf32>
    %94 = arith.addf %91, %93 : vector<8x8xf32>
    %95 = arith.subf %94, %1 : vector<8x8xf32>
    %c496 = arith.constant 496 : index
    %c0_54 = arith.constant 0 : index
    %96 = vector.load %arg3[%c496, %c0_54] : memref<568x64xf32, #tpu.memory_space<vmem>>, vector<8x24xf32>
    %cst_55 = arith.constant dense<0.000000e+00> : vector<8x24xf32>
    %97 = tpu.matmul %95, %96, %cst_55 {dimension_numbers = #tpu.dot_dimension_numbers<[1], [0], [0], [1], [0, 0, 1, 1], [], []>} : vector<8x8xf32>, vector<8x24xf32>, vector<8x24xf32> -> vector<8x24xf32>
    %c563 = arith.constant 563 : index
    %c0_56 = arith.constant 0 : index
    %98 = vector.load %arg3[%c563, %c0_56] : memref<568x64xf32, #tpu.memory_space<vmem>>, vector<1x24xf32>
    %99 = vector.broadcast %98 : vector<1x24xf32> to vector<8x24xf32>
    %100 = arith.addf %97, %99 : vector<8x24xf32>
    %cst_57 = arith.constant 0.000000e+00 : f32
    %101 = vector.broadcast %cst_57 : f32 to vector<8x24xf32>
    %102 = arith.maximumf %100, %101 : vector<8x24xf32>
    %c504 = arith.constant 504 : index
    %c0_58 = arith.constant 0 : index
    %103 = vector.load %arg3[%c504, %c0_58] : memref<568x64xf32, #tpu.memory_space<vmem>>, vector<24x8xf32>
    %cst_59 = arith.constant dense<0.000000e+00> : vector<8x8xf32>
    %104 = tpu.matmul %102, %103, %cst_59 {dimension_numbers = #tpu.dot_dimension_numbers<[1], [0], [0], [1], [0, 0, 1, 1], [], []>} : vector<8x24xf32>, vector<24x8xf32>, vector<8x8xf32> -> vector<8x8xf32>
    %c564 = arith.constant 564 : index
    %c0_60 = arith.constant 0 : index
    %105 = vector.load %arg3[%c564, %c0_60] : memref<568x64xf32, #tpu.memory_space<vmem>>, vector<1x8xf32>
    %106 = vector.broadcast %105 : vector<1x8xf32> to vector<8x8xf32>
    %107 = arith.addf %104, %106 : vector<8x8xf32>
    %cst_61 = arith.constant 0.000000e+00 : f32
    %108 = vector.broadcast %cst_61 : f32 to vector<8x8xf32>
    %109 = arith.maximumf %107, %108 : vector<8x8xf32>
    %110 = arith.addf %109, %1 : vector<8x8xf32>
    %c528 = arith.constant 528 : index
    %c0_62 = arith.constant 0 : index
    %111 = vector.load %arg3[%c528, %c0_62] : memref<568x64xf32, #tpu.memory_space<vmem>>, vector<8x16xf32>
    %cst_63 = arith.constant dense<0.000000e+00> : vector<8x16xf32>
    %112 = tpu.matmul %110, %111, %cst_63 {dimension_numbers = #tpu.dot_dimension_numbers<[1], [0], [0], [1], [0, 0, 1, 1], [], []>} : vector<8x8xf32>, vector<8x16xf32>, vector<8x16xf32> -> vector<8x16xf32>
    %c565 = arith.constant 565 : index
    %c0_64 = arith.constant 0 : index
    %113 = vector.load %arg3[%c565, %c0_64] : memref<568x64xf32, #tpu.memory_space<vmem>>, vector<1x16xf32>
    %114 = vector.broadcast %113 : vector<1x16xf32> to vector<8x16xf32>
    %115 = arith.addf %112, %114 : vector<8x16xf32>
    %cst_65 = arith.constant 0.000000e+00 : f32
    %116 = vector.broadcast %cst_65 : f32 to vector<8x16xf32>
    %117 = arith.maximumf %115, %116 : vector<8x16xf32>
    %c536 = arith.constant 536 : index
    %c0_66 = arith.constant 0 : index
    %118 = vector.load %arg3[%c536, %c0_66] : memref<568x64xf32, #tpu.memory_space<vmem>>, vector<16x8xf32>
    %cst_67 = arith.constant dense<0.000000e+00> : vector<8x8xf32>
    %119 = tpu.matmul %117, %118, %cst_67 {dimension_numbers = #tpu.dot_dimension_numbers<[1], [0], [0], [1], [0, 0, 1, 1], [], []>} : vector<8x16xf32>, vector<16x8xf32>, vector<8x8xf32> -> vector<8x8xf32>
    %c566 = arith.constant 566 : index
    %c0_68 = arith.constant 0 : index
    %120 = vector.load %arg3[%c566, %c0_68] : memref<568x64xf32, #tpu.memory_space<vmem>>, vector<1x8xf32>
    %121 = vector.broadcast %120 : vector<1x8xf32> to vector<8x8xf32>
    %122 = arith.addf %119, %121 : vector<8x8xf32>
    %cst_69 = arith.constant dense<0xFF800000> : vector<8xf32>
    %123 = vector.multi_reduction <maximumf>, %122, %cst_69 [1] : vector<8x8xf32> to vector<8xf32>
    %124 = vector.shape_cast %123 : vector<8xf32> to vector<8x1xf32>
    %125 = vector.broadcast %124 : vector<8x1xf32> to vector<8x8xf32>
    %126 = arith.subf %122, %125 : vector<8x8xf32>
    %127 = math.exp %126 : vector<8x8xf32>
    %cst_70 = arith.constant dense<0.000000e+00> : vector<8xf32>
    %128 = vector.multi_reduction <add>, %127, %cst_70 [1] : vector<8x8xf32> to vector<8xf32>
    %129 = vector.shape_cast %128 : vector<8xf32> to vector<8x1xf32>
    %130 = vector.broadcast %129 : vector<8x1xf32> to vector<8x8xf32>
    %131 = arith.divf %127, %130 : vector<8x8xf32>
    %c0_71 = arith.constant 0 : index
    %c0_72 = arith.constant 0 : index
    %132 = vector.load %arg4[%c0_71, %c0_72] : memref<8x8xf32, #tpu.memory_space<vmem>>, vector<8x8xf32>
    tpu.vector_store %arg4[%c0_71, %c0_72], %131 {strides = array<i32>} : memref<8x8xf32, #tpu.memory_space<vmem>>, vector<8x8xf32>,
    return
  }
}

</mosaic_0001>

<llo_original>
// kernel: model_portefolio_forward_batched.1
$region0: #{model_portefolio_forward_batched.1}
  #allocation0 [shape = 'u32[]', space=smem, size = 0x4, offset = 0x4, fixed_abs, tag = 'smem constant byte address 0x4 - core index']
  #allocation1 [shape = 'u32[144,128]{1,0:T(1,128)}', space=vmem, size = 0x12000, scoped, tag = 'internal scratch']
  %s0 = inlined_call_operand.vmem [shape: f32[8,64], index: 0, kind: input, shape index: {}]
  %s1 = inlined_call_operand.vmem [shape: f32[8,8], index: 1, kind: input, shape index: {}]
  %s2 = inlined_call_operand.vmem [shape: f32[8,4], index: 2, kind: input, shape index: {}]
  %s3 = inlined_call_operand.vmem [shape: f32[568,64], index: 3, kind: input, shape index: {}]
  %s4 = inlined_call_operand.hbm [shape: f32[8,8], index: 4, kind: output, shape index: {}]
  %s5 = sld [smem:[#allocation0]]
  $region26: #{model_portefolio_forward_batched.1} parent=0
    _
  %s7 = ssub.s32 1, %s5
  %s8 = scalar_select 0, %s7, %s5
  $region1: #{model_portefolio_forward_batched.1} parent=0
    #allocation2 [shape = 'u8[4096]{0}', space=vmem, size = 0x1000, scoped, tag = 'output window, operand 0, single buffered']
    #allocation3 [shape = 's32[1]{0}', space=sflag, size = 0x4, scoped, tag = 'scoped memory for model_portefolio_forward_batched.1']
    %9 = vsyncpa [#allocation3], 0
    // Predicated region
    $region2: #{model_portefolio_forward_batched.1} parent=1 // pred_check
      _
    $region3: #{model_portefolio_forward_batched.1} parent=1 // pred_check_branch
      %11 = sbr.rel (0) target = $region5
    $region4: #{model_portefolio_forward_batched.1} parent=1 // pred_region
      _
    $region5: #{model_portefolio_forward_batched.1} parent=1 // pred_fallthru
      _
    // Predicated region
    $region6: #{model_portefolio_forward_batched.1} parent=1 // pred_check
      _
    $region7: #{model_portefolio_forward_batched.1} parent=1 // pred_check_branch
      %13 = sbr.rel (0) target = $region9
    $region8: #{model_portefolio_forward_batched.1} parent=1 // pred_region
      _
    $region9: #{model_portefolio_forward_batched.1} parent=1 // pred_fallthru
      _
    // Predicated region
    $region10: #{model_portefolio_forward_batched.1} parent=1 // pred_check
      _
    $region11: #{model_portefolio_forward_batched.1} parent=1 // pred_check_branch
      %15 = sbr.rel (0) target = $region13
    $region12: #{model_portefolio_forward_batched.1} parent=1 // pred_region
      _
    $region13: #{model_portefolio_forward_batched.1} parent=1 // pred_fallthru
      _
    // Predicated region
    $region14: #{model_portefolio_forward_batched.1} parent=1 // pred_check
      _
    $region15: #{model_portefolio_forward_batched.1} parent=1 // pred_check_branch
      %17 = sbr.rel (0) target = $region17
    $region16: #{model_portefolio_forward_batched.1} parent=1 // pred_region
      _
    $region17: #{model_portefolio_forward_batched.1} parent=1 // pred_fallthru
      _
    %v18 = vld [vmem:[%s0] sm:$0xff]
    %v19 = vld [vmem:[%s1] sm:$0xff]
    %v20 = vld [vmem:[%s2] sm:$0xff]
    %v21 = vld [vmem:[%s3] sm:$0xff]
    %v22 = vld [vmem:[%s3 + $0x8] sm:$0xff]
    %v23 = vld [vmem:[%s3 + $0x10] sm:$0xff]
    %v24 = vld [vmem:[%s3 + $0x18] sm:$0xff]
    %v25 = vld [vmem:[%s3 + $0x20] sm:$0xff]
    %v26 = vld [vmem:[%s3 + $0x28] sm:$0xff]
    %v27 = vld [vmem:[%s3 + $0x30] sm:$0xff]
    %v28 = vld [vmem:[%s3 + $0x38] sm:$0xff]
    %v29 = vld [vmem:[%s3 + $0x228] sm:$0x1]
    %v30 = vlaneseq
    %v31 = vshrl.u32 %v30, 7
    %v32 = vsub.s32 0, %v31
    %v33 = vrot.slane %v29, %v32
    %vm34 = vcmask 523264
    %v36 = vsel %vm34, %v18, 0
    %38 = vmatprep.subr.mxu0 0.0
    %39 = vmatpush1.msra.mxu0 %v21
    %40 = vmatprep.subr.mxu0 0.0
    %41 = vmatpush1.msra.mxu0 %v22
    %42 = vmatprep.subr.mxu0 0.0
    %43 = vmatpush1.msra.mxu0 %v23
    %44 = vmatprep.subr.mxu0 0.0
    %45 = vmatpush1.msra.mxu0 %v24
    %46 = vmatprep.subr.mxu0 0.0
    %47 = vmatpush1.msra.mxu0 %v25
    %48 = vmatprep.subr.mxu0 0.0
    %49 = vmatpush1.msra.mxu0 %v26
    %50 = vmatprep.subr.mxu0 0.0
    %51 = vmatpush1.msra.mxu0 %v27
    %52 = vmatprep.subr.mxu0 0.0
    %53 = vmatpush1.msra.mxu0 %v28
    %54 = vmatprep.subr.mxu0 0.0
    %55 = vmatpush1.msra.mxu0 0.0
    %56 = vmatprep.subr.mxu0 0.0
    %57 = vmatpush1.msra.mxu0 0.0
    %58 = vmatprep.subr.mxu0 0.0
    %59 = vmatpush1.msra.mxu0 0.0
    %60 = vmatprep.subr.mxu0 0.0
    %61 = vmatpush1.msra.mxu0 0.0
    %62 = vmatprep.subr.mxu0 0.0
    %63 = vmatpush1.msra.mxu0 0.0
    %64 = vmatprep.subr.mxu0 0.0
    %65 = vmatpush1.msra.mxu0 0.0
    %66 = vmatprep.subr.mxu0 0.0
    %67 = vmatpush1.msra.mxu0 0.0
    %68 = vmatprep.subr.mxu0 0.0
    %69 = vmatpush1.msra.mxu0 0.0
    %70 = vmatprep.subr.mxu0 0.0
    %71 = vmatpush1.msra.mxu0 0.0
    %72 = vmatprep.subr.mxu0 0.0
    %73 = vmatpush1.msra.mxu0 0.0
    %74 = vmatprep.subr.mxu0 0.0
    %75 = vmatpush1.msra.mxu0 0.0
    %76 = vmatprep.subr.mxu0 0.0
    %77 = vmatpush1.msra.mxu0 0.0
    %78 = vmatprep.subr.mxu0 0.0
    %79 = vmatpush1.msra.mxu0 0.0
    %80 = vmatprep.subr.mxu0 0.0
    %81 = vmatpush1.msra.mxu0 0.0
    %82 = vmatprep.subr.mxu0 0.0
    %83 = vmatpush1.msra.mxu0 0.0
    %84 = vmatprep.subr.mxu0 0.0
    %85 = vmatpush1.msra.mxu0 0.0
    %86 = vmatprep.subr.mxu0 0.0
    %87 = vmatpush1.msra.mxu0 0.0
    %88 = vmatprep.subr.mxu0 0.0
    %89 = vmatpush1.msra.mxu0 0.0
    %90 = vmatprep.subr.mxu0 0.0
    %91 = vmatpush1.msra.mxu0 0.0
    %92 = vmatprep.subr.mxu0 0.0
    %93 = vmatpush1.msra.mxu0 0.0
    %94 = vmatprep.subr.mxu0 0.0
    %95 = vmatpush1.msra.mxu0 0.0
    %96 = vmatprep.subr.mxu0 0.0
    %97 = vmatpush1.msra.mxu0 0.0
    %98 = vmatprep.subr.mxu0 0.0
    %99 = vmatpush1.msra.mxu0 0.0
    %100 = vmatprep.subr.mxu0 0.0
    %101 = vmatpush1.msra.mxu0 0.0
    %102 = vmatprep.mubr.f32.mxu0 0.0
    %103 = vmatmul.mubr.f32.gmra.mrb[0].mxu0 %v36
    %v104 = vpop.f32.mrb[0].mxu0
    %v105 = vadd.f32 %v33, %v104
    %v106 = vpop.f32.mrb[0].mxu0
    %107 = vdwg.mxu0
    %v108 = vld [vmem:[%s3 + $0x40] sm:$0xff]
    %v109 = vld [vmem:[%s3 + $0x48] sm:$0xff]
    %v110 = vld [vmem:[%s3 + $0x50] sm:$0xff]
    %v111 = vld [vmem:[%s3 + $0x58] sm:$0xff]
    %v112 = vld [vmem:[%s3 + $0x60] sm:$0xff]
    %v113 = vld [vmem:[%s3 + $0x68] sm:$0xff]
    %v114 = vld [vmem:[%s3 + $0x70] sm:$0xff]
    %v115 = vld [vmem:[%s3 + $0x78] sm:$0xff]
    %v116 = vld [vmem:[%s3 + $0x229] sm:$0x1]
    %v117 = vlaneseq
    %v118 = vshrl.u32 %v117, 7
    %v119 = vsub.s32 0, %v118
    %v120 = vrot.slane %v116, %v119
    %121 = vmatprep.subr.mxu0 0.0
    %122 = vmatpush1.msra.mxu0 %v108
    %123 = vmatprep.subr.mxu0 0.0
    %124 = vmatpush1.msra.mxu0 %v109
    %125 = vmatprep.subr.mxu0 0.0
    %126 = vmatpush1.msra.mxu0 %v110
    %127 = vmatprep.subr.mxu0 0.0
    %128 = vmatpush1.msra.mxu0 %v111
    %129 = vmatprep.subr.mxu0 0.0
    %130 = vmatpush1.msra.mxu0 %v112
    %131 = vmatprep.subr.mxu0 0.0
    %132 = vmatpush1.msra.mxu0 %v113
    %133 = vmatprep.subr.mxu0 0.0
    %134 = vmatpush1.msra.mxu0 %v114
    %135 = vmatprep.subr.mxu0 0.0
    %136 = vmatpush1.msra.mxu0 %v115
    %137 = vmatprep.subr.mxu0 0.0
    %138 = vmatpush1.msra.mxu0 0.0
    %139 = vmatprep.subr.mxu0 0.0
    %140 = vmatpush1.msra.mxu0 0.0
    %141 = vmatprep.subr.mxu0 0.0
    %142 = vmatpush1.msra.mxu0 0.0
    %143 = vmatprep.subr.mxu0 0.0
    %144 = vmatpush1.msra.mxu0 0.0
    %145 = vmatprep.subr.mxu0 0.0
    %146 = vmatpush1.msra.mxu0 0.0
    %147 = vmatprep.subr.mxu0 0.0
    %148 = vmatpush1.msra.mxu0 0.0
    %149 = vmatprep.subr.mxu0 0.0
    %150 = vmatpush1.msra.mxu0 0.0
    %151 = vmatprep.subr.mxu0 0.0
    %152 = vmatpush1.msra.mxu0 0.0
    %153 = vmatprep.subr.mxu0 0.0
    %154 = vmatpush1.msra.mxu0 0.0
    %155 = vmatprep.subr.mxu0 0.0
    %156 = vmatpush1.msra.mxu0 0.0
    %157 = vmatprep.subr.mxu0 0.0
    %158 = vmatpush1.msra.mxu0 0.0
    %159 = vmatprep.subr.mxu0 0.0
    %160 = vmatpush1.msra.mxu0 0.0
    %161 = vmatprep.subr.mxu0 0.0
    %162 = vmatpush1.msra.mxu0 0.0
    %163 = vmatprep.subr.mxu0 0.0
    %164 = vmatpush1.msra.mxu0 0.0
    %165 = vmatprep.subr.mxu0 0.0
    %166 = vmatpush1.msra.mxu0 0.0
    %167 = vmatprep.subr.mxu0 0.0
    %168 = vmatpush1.msra.mxu0 0.0
    %169 = vmatprep.subr.mxu0 0.0
    %170 = vmatpush1.msra.mxu0 0.0
    %171 = vmatprep.subr.mxu0 0.0
    %172 = vmatpush1.msra.mxu0 0.0
    %173 = vmatprep.subr.mxu0 0.0
    %174 = vmatpush1.msra.mxu0 0.0
    %175 = vmatprep.subr.mxu0 0.0
    %176 = vmatpush1.msra.mxu0 0.0
    %177 = vmatprep.subr.mxu0 0.0
    %178 = vmatpush1.msra.mxu0 0.0
    %179 = vmatprep.subr.mxu0 0.0
    %180 = vmatpush1.msra.mxu0 0.0
    %181 = vmatprep.subr.mxu0 0.0
    %182 = vmatpush1.msra.mxu0 0.0
    %183 = vmatprep.subr.mxu0 0.0
    %184 = vmatpush1.msra.mxu0 0.0
    %185 = vmatprep.mubr.f32.mxu0 0.0
    %186 = vmatmul.mubr.f32.gmra.mrb[0].mxu0 %v36
    %v187 = vpop.f32.mrb[0].mxu0
    %v188 = vadd.f32 %v120, %v187
    %v189 = vpop.f32.mrb[0].mxu0
    %190 = vdwg.mxu0
    %v191 = vld [vmem:[%s3 + $0x80] sm:$0xff]
    %v192 = vld [vmem:[%s3 + $0x88] sm:$0xff]
    %v193 = vld [vmem:[%s3 + $0x90] sm:$0xff]
    %v194 = vld [vmem:[%s3 + $0x98] sm:$0xff]
    %v195 = vld [vmem:[%s3 + $0xa0] sm:$0xff]
    %v196 = vld [vmem:[%s3 + $0xa8] sm:$0xff]
    %v197 = vld [vmem:[%s3 + $0xb0] sm:$0xff]
    %v198 = vld [vmem:[%s3 + $0xb8] sm:$0xff]
    %v199 = vld [vmem:[%s3 + $0x22a] sm:$0x1]
    %v200 = vlaneseq
    %v201 = vshrl.u32 %v200, 7
    %v202 = vsub.s32 0, %v201
    %v203 = vrot.slane %v199, %v202
    %204 = vmatprep.subr.mxu0 0.0
    %205 = vmatpush1.msra.mxu0 %v191
    %206 = vmatprep.subr.mxu0 0.0
    %207 = vmatpush1.msra.mxu0 %v192
    %208 = vmatprep.subr.mxu0 0.0
    %209 = vmatpush1.msra.mxu0 %v193
    %210 = vmatprep.subr.mxu0 0.0
    %211 = vmatpush1.msra.mxu0 %v194
    %212 = vmatprep.subr.mxu0 0.0
    %213 = vmatpush1.msra.mxu0 %v195
    %214 = vmatprep.subr.mxu0 0.0
    %215 = vmatpush1.msra.mxu0 %v196
    %216 = vmatprep.subr.mxu0 0.0
    %217 = vmatpush1.msra.mxu0 %v197
    %218 = vmatprep.subr.mxu0 0.0
    %219 = vmatpush1.msra.mxu0 %v198
    %220 = vmatprep.subr.mxu0 0.0
    %221 = vmatpush1.msra.mxu0 0.0
    %222 = vmatprep.subr.mxu0 0.0
    %223 = vmatpush1.msra.mxu0 0.0
    %224 = vmatprep.subr.mxu0 0.0
    %225 = vmatpush1.msra.mxu0 0.0
    %226 = vmatprep.subr.mxu0 0.0
    %227 = vmatpush1.msra.mxu0 0.0
    %228 = vmatprep.subr.mxu0 0.0
    %229 = vmatpush1.msra.mxu0 0.0
    %230 = vmatprep.subr.mxu0 0.0
    %231 = vmatpush1.msra.mxu0 0.0
    %232 = vmatprep.subr.mxu0 0.0
    %233 = vmatpush1.msra.mxu0 0.0
    %234 = vmatprep.subr.mxu0 0.0
    %235 = vmatpush1.msra.mxu0 0.0
    %236 = vmatprep.subr.mxu0 0.0
    %237 = vmatpush1.msra.mxu0 0.0
    %238 = vmatprep.subr.mxu0 0.0
    %239 = vmatpush1.msra.mxu0 0.0
    %240 = vmatprep.subr.mxu0 0.0
    %241 = vmatpush1.msra.mxu0 0.0
    %242 = vmatprep.subr.mxu0 0.0
    %243 = vmatpush1.msra.mxu0 0.0
    %244 = vmatprep.subr.mxu0 0.0
    %245 = vmatpush1.msra.mxu0 0.0
    %246 = vmatprep.subr.mxu0 0.0
    %247 = vmatpush1.msra.mxu0 0.0
    %248 = vmatprep.subr.mxu0 0.0
    %249 = vmatpush1.msra.mxu0 0.0
    %250 = vmatprep.subr.mxu0 0.0
    %251 = vmatpush1.msra.mxu0 0.0
    %252 = vmatprep.subr.mxu0 0.0
    %253 = vmatpush1.msra.mxu0 0.0
    %254 = vmatprep.subr.mxu0 0.0
    %255 = vmatpush1.msra.mxu0 0.0
    %256 = vmatprep.subr.mxu0 0.0
    %257 = vmatpush1.msra.mxu0 0.0
    %258 = vmatprep.subr.mxu0 0.0
    %259 = vmatpush1.msra.mxu0 0.0
    %260 = vmatprep.subr.mxu0 0.0
    %261 = vmatpush1.msra.mxu0 0.0
    %262 = vmatprep.subr.mxu0 0.0
    %263 = vmatpush1.msra.mxu0 0.0
    %264 = vmatprep.subr.mxu0 0.0
    %265 = vmatpush1.msra.mxu0 0.0
    %266 = vmatprep.subr.mxu0 0.0
    %267 = vmatpush1.msra.mxu0 0.0
    %268 = vmatprep.mubr.f32.mxu0 0.0
    %269 = vmatmul.mubr.f32.gmra.mrb[0].mxu0 %v36
    %v270 = vpop.f32.mrb[0].mxu0
    %v271 = vadd.f32 %v203, %v270
    %v272 = vpop.f32.mrb[0].mxu0
    %273 = vdwg.mxu0
    %v274 = vmax.f32 %v105, %v188
    %v275 = vmax.f32 %v274, %v271
    %v276 = vld [vmem:[%s3 + $0xc0] sm:$0xff]
    %v277 = vld [vmem:[%s3 + $0x22b] sm:$0x1]
    %v278 = vlaneseq
    %v279 = vshrl.u32 %v278, 7
    %v280 = vsub.s32 0, %v279
    %v281 = vrot.slane %v277, %v280
    %vm282 = vcmask 64512
    %v284 = vsel %vm282, %v275, 0
    %286 = vmatprep.subr.mxu0 0.0
    %287 = vmatpush1.msra.mxu0 %v276
    %288 = vmatprep.subr.mxu0 0.0
    %289 = vmatpush1.msra.mxu0 0.0
    %290 = vmatprep.subr.mxu0 0.0
    %291 = vmatpush1.msra.mxu0 0.0
    %292 = vmatprep.subr.mxu0 0.0
    %293 = vmatpush1.msra.mxu0 0.0
    %294 = vmatprep.subr.mxu0 0.0
    %295 = vmatpush1.msra.mxu0 0.0
    %296 = vmatprep.subr.mxu0 0.0
    %297 = vmatpush1.msra.mxu0 0.0
    %298 = vmatprep.subr.mxu0 0.0
    %299 = vmatpush1.msra.mxu0 0.0
    %300 = vmatprep.subr.mxu0 0.0
    %301 = vmatpush1.msra.mxu0 0.0
    %302 = vmatprep.subr.mxu0 0.0
    %303 = vmatpush1.msra.mxu0 0.0
    %304 = vmatprep.subr.mxu0 0.0
    %305 = vmatpush1.msra.mxu0 0.0
    %306 = vmatprep.subr.mxu0 0.0
    %307 = vmatpush1.msra.mxu0 0.0
    %308 = vmatprep.subr.mxu0 0.0
    %309 = vmatpush1.msra.mxu0 0.0
    %310 = vmatprep.subr.mxu0 0.0
    %311 = vmatpush1.msra.mxu0 0.0
    %312 = vmatprep.subr.mxu0 0.0
    %313 = vmatpush1.msra.mxu0 0.0
    %314 = vmatprep.subr.mxu0 0.0
    %315 = vmatpush1.msra.mxu0 0.0
    %316 = vmatprep.subr.mxu0 0.0
    %317 = vmatpush1.msra.mxu0 0.0
    %318 = vmatprep.subr.mxu0 0.0
    %319 = vmatpush1.msra.mxu0 0.0
    %320 = vmatprep.subr.mxu0 0.0
    %321 = vmatpush1.msra.mxu0 0.0
    %322 = vmatprep.subr.mxu0 0.0
    %323 = vmatpush1.msra.mxu0 0.0
    %324 = vmatprep.subr.mxu0 0.0
    %325 = vmatpush1.msra.mxu0 0.0
    %326 = vmatprep.subr.mxu0 0.0
    %327 = vmatpush1.msra.mxu0 0.0
    %328 = vmatprep.subr.mxu0 0.0
    %329 = vmatpush1.msra.mxu0 0.0
    %330 = vmatprep.subr.mxu0 0.0
    %331 = vmatpush1.msra.mxu0 0.0
    %332 = vmatprep.subr.mxu0 0.0
    %333 = vmatpush1.msra.mxu0 0.0
    %334 = vmatprep.subr.mxu0 0.0
    %335 = vmatpush1.msra.mxu0 0.0
    %336 = vmatprep.subr.mxu0 0.0
    %337 = vmatpush1.msra.mxu0 0.0
    %338 = vmatprep.subr.mxu0 0.0
    %339 = vmatpush1.msra.mxu0 0.0
    %340 = vmatprep.subr.mxu0 0.0
    %341 = vmatpush1.msra.mxu0 0.0
    %342 = vmatprep.subr.mxu0 0.0
    %343 = vmatpush1.msra.mxu0 0.0
    %344 = vmatprep.subr.mxu0 0.0
    %345 = vmatpush1.msra.mxu0 0.0
    %346 = vmatprep.subr.mxu0 0.0
    %347 = vmatpush1.msra.mxu0 0.0
    %348 = vmatprep.subr.mxu0 0.0
    %349 = vmatpush1.msra.mxu0 0.0
    %350 = vmatprep.mubr.f32.mxu0 0.0
    %351 = vmatmul.mubr.f32.gmra.mrb[0].mxu0 %v284
    %v352 = vpop.f32.mrb[0].mxu0
    %v353 = vadd.f32 %v281, %v352
    %v354 = vpop.f32.mrb[0].mxu0
    %355 = vdwg.mxu0
    %v356 = vmax.f32 %v353, 0.0
    %v358 = vsel %vm282, %v19, 0
    %360 = vmatprep.subr.mxu0 0.0
    %361 = vmatpush1.msra.mxu0 %v276
    %362 = vmatprep.subr.mxu0 0.0
    %363 = vmatpush1.msra.mxu0 0.0
    %364 = vmatprep.subr.mxu0 0.0
    %365 = vmatpush1.msra.mxu0 0.0
    %366 = vmatprep.subr.mxu0 0.0
    %367 = vmatpush1.msra.mxu0 0.0
    %368 = vmatprep.subr.mxu0 0.0
    %369 = vmatpush1.msra.mxu0 0.0
    %370 = vmatprep.subr.mxu0 0.0
    %371 = vmatpush1.msra.mxu0 0.0
    %372 = vmatprep.subr.mxu0 0.0
    %373 = vmatpush1.msra.mxu0 0.0
    %374 = vmatprep.subr.mxu0 0.0
    %375 = vmatpush1.msra.mxu0 0.0
    %376 = vmatprep.subr.mxu0 0.0
    %377 = vmatpush1.msra.mxu0 0.0
    %378 = vmatprep.subr.mxu0 0.0
    %379 = vmatpush1.msra.mxu0 0.0
    %380 = vmatprep.subr.mxu0 0.0
    %381 = vmatpush1.msra.mxu0 0.0
    %382 = vmatprep.subr.mxu0 0.0
    %383 = vmatpush1.msra.mxu0 0.0
    %384 = vmatprep.subr.mxu0 0.0
    %385 = vmatpush1.msra.mxu0 0.0
    %386 = vmatprep.subr.mxu0 0.0
    %387 = vmatpush1.msra.mxu0 0.0
    %388 = vmatprep.subr.mxu0 0.0
    %389 = vmatpush1.msra.mxu0 0.0
    %390 = vmatprep.subr.mxu0 0.0
    %391 = vmatpush1.msra.mxu0 0.0
    %392 = vmatprep.subr.mxu0 0.0
    %393 = vmatpush1.msra.mxu0 0.0
    %394 = vmatprep.subr.mxu0 0.0
    %395 = vmatpush1.msra.mxu0 0.0
    %396 = vmatprep.subr.mxu0 0.0
    %397 = vmatpush1.msra.mxu0 0.0
    %398 = vmatprep.subr.mxu0 0.0
    %399 = vmatpush1.msra.mxu0 0.0
    %400 = vmatprep.subr.mxu0 0.0
    %401 = vmatpush1.msra.mxu0 0.0
    %402 = vmatprep.subr.mxu0 0.0
    %403 = vmatpush1.msra.mxu0 0.0
    %404 = vmatprep.subr.mxu0 0.0
    %405 = vmatpush1.msra.mxu0 0.0
    %406 = vmatprep.subr.mxu0 0.0
    %407 = vmatpush1.msra.mxu0 0.0
    %408 = vmatprep.subr.mxu0 0.0
    %409 = vmatpush1.msra.mxu0 0.0
    %410 = vmatprep.subr.mxu0 0.0
    %411 = vmatpush1.msra.mxu0 0.0
    %412 = vmatprep.subr.mxu0 0.0
    %413 = vmatpush1.msra.mxu0 0.0
    %414 = vmatprep.subr.mxu0 0.0
    %415 = vmatpush1.msra.mxu0 0.0
    %416 = vmatprep.subr.mxu0 0.0
    %417 = vmatpush1.msra.mxu0 0.0
    %418 = vmatprep.subr.mxu0 0.0
    %419 = vmatpush1.msra.mxu0 0.0
    %420 = vmatprep.subr.mxu0 0.0
    %421 = vmatpush1.msra.mxu0 0.0
    %422 = vmatprep.subr.mxu0 0.0
    %423 = vmatpush1.msra.mxu0 0.0
    %424 = vmatprep.mubr.f32.mxu0 0.0
    %425 = vmatmul.mubr.f32.gmra.mrb[0].mxu0 %v358
    %v426 = vpop.f32.mrb[0].mxu0
    %v427 = vadd.f32 %v281, %v426
    %v428 = vpop.f32.mrb[0].mxu0
    %429 = vdwg.mxu0
    %v430 = vmax.f32 %v427, 0.0
    %v431 = vld [vmem:[%s3 + $0xc8] sm:$0xf]
    %v432 = vld [vmem:[%s3 + $0x22c] sm:$0x1]
    %v433 = vlaneseq
    %v434 = vshrl.u32 %v433, 7
    %v435 = vsub.s32 0, %v434
    %v436 = vrot.slane %v432, %v435
    %vm437 = vcmask 31744
    %v439 = vsel %vm437, %v20, 0
    %vm441 = vcmask 1043456
    %v443 = vsel %vm441, %v431, 0
    %445 = vmatprep.subr.mxu0 0.0
    %446 = vmatpush1.msra.mxu0 %v443
    %447 = vmatprep.subr.mxu0 0.0
    %448 = vmatpush1.msra.mxu0 0.0
    %449 = vmatprep.subr.mxu0 0.0
    %450 = vmatpush1.msra.mxu0 0.0
    %451 = vmatprep.subr.mxu0 0.0
    %452 = vmatpush1.msra.mxu0 0.0
    %453 = vmatprep.subr.mxu0 0.0
    %454 = vmatpush1.msra.mxu0 0.0
    %455 = vmatprep.subr.mxu0 0.0
    %456 = vmatpush1.msra.mxu0 0.0
    %457 = vmatprep.subr.mxu0 0.0
    %458 = vmatpush1.msra.mxu0 0.0
    %459 = vmatprep.subr.mxu0 0.0
    %460 = vmatpush1.msra.mxu0 0.0
    %461 = vmatprep.subr.mxu0 0.0
    %462 = vmatpush1.msra.mxu0 0.0
    %463 = vmatprep.subr.mxu0 0.0
    %464 = vmatpush1.msra.mxu0 0.0
    %465 = vmatprep.subr.mxu0 0.0
    %466 = vmatpush1.msra.mxu0 0.0
    %467 = vmatprep.subr.mxu0 0.0
    %468 = vmatpush1.msra.mxu0 0.0
    %469 = vmatprep.subr.mxu0 0.0
    %470 = vmatpush1.msra.mxu0 0.0
    %471 = vmatprep.subr.mxu0 0.0
    %472 = vmatpush1.msra.mxu0 0.0
    %473 = vmatprep.subr.mxu0 0.0
    %474 = vmatpush1.msra.mxu0 0.0
    %475 = vmatprep.subr.mxu0 0.0
    %476 = vmatpush1.msra.mxu0 0.0
    %477 = vmatprep.subr.mxu0 0.0
    %478 = vmatpush1.msra.mxu0 0.0
    %479 = vmatprep.subr.mxu0 0.0
    %480 = vmatpush1.msra.mxu0 0.0
    %481 = vmatprep.subr.mxu0 0.0
    %482 = vmatpush1.msra.mxu0 0.0
    %483 = vmatprep.subr.mxu0 0.0
    %484 = vmatpush1.msra.mxu0 0.0
    %485 = vmatprep.subr.mxu0 0.0
    %486 = vmatpush1.msra.mxu0 0.0
    %487 = vmatprep.subr.mxu0 0.0
    %488 = vmatpush1.msra.mxu0 0.0
    %489 = vmatprep.subr.mxu0 0.0
    %490 = vmatpush1.msra.mxu0 0.0
    %491 = vmatprep.subr.mxu0 0.0
    %492 = vmatpush1.msra.mxu0 0.0
    %493 = vmatprep.subr.mxu0 0.0
    %494 = vmatpush1.msra.mxu0 0.0
    %495 = vmatprep.subr.mxu0 0.0
    %496 = vmatpush1.msra.mxu0 0.0
    %497 = vmatprep.subr.mxu0 0.0
    %498 = vmatpush1.msra.mxu0 0.0
    %499 = vmatprep.subr.mxu0 0.0
    %500 = vmatpush1.msra.mxu0 0.0
    %501 = vmatprep.subr.mxu0 0.0
    %502 = vmatpush1.msra.mxu0 0.0
    %503 = vmatprep.subr.mxu0 0.0
    %504 = vmatpush1.msra.mxu0 0.0
    %505 = vmatprep.subr.mxu0 0.0
    %506 = vmatpush1.msra.mxu0 0.0
    %507 = vmatprep.subr.mxu0 0.0
    %508 = vmatpush1.msra.mxu0 0.0
    %509 = vmatprep.mubr.f32.mxu0 0.0
    %510 = vmatmul.mubr.f32.gmra.mrb[0].mxu0 %v439
    %v511 = vpop.f32.mrb[0].mxu0
    %v512 = vadd.f32 %v436, %v511
    %v513 = vpop.f32.mrb[0].mxu0
    %514 = vdwg.mxu0
    %v515 = vmax.f32 %v512, 0.0
    %v516 = vld [vmem:[%s3 + $0xd0] sm:$0xff]
    %v517 = vld [vmem:[%s3 + $0xd8] sm:$0xff]
    %v518 = vld [vmem:[%s3 + $0xe0] sm:$0xff]
    %v519 = vld [vmem:[%s3 + $0xe8] sm:$0xff]
    %v520 = vld [vmem:[%s3 + $0xf0] sm:$0xff]
    %v521 = vld [vmem:[%s3 + $0xf8] sm:$0xff]
    %v522 = vld [vmem:[%s3 + $0x100] sm:$0xff]
    %v523 = vld [vmem:[%s3 + $0x108] sm:$0xff]
    %vm524 = vcmask 261120
    %v526 = vsel %vm524, %v430, 0
    %528 = vmatprep.subr.mxu0 0.0
    %529 = vmatpush1.msra.mxu0 %v520
    %530 = vmatprep.subr.mxu0 0.0
    %531 = vmatpush1.msra.mxu0 %v521
    %532 = vmatprep.subr.mxu0 0.0
    %533 = vmatpush1.msra.mxu0 %v522
    %534 = vmatprep.subr.mxu0 0.0
    %535 = vmatpush1.msra.mxu0 %v523
    %536 = vmatprep.subr.mxu0 0.0
    %537 = vmatpush1.msra.mxu0 0.0
    %538 = vmatprep.subr.mxu0 0.0
    %539 = vmatpush1.msra.mxu0 0.0
    %540 = vmatprep.subr.mxu0 0.0
    %541 = vmatpush1.msra.mxu0 0.0
    %542 = vmatprep.subr.mxu0 0.0
    %543 = vmatpush1.msra.mxu0 0.0
    %544 = vmatprep.subr.mxu0 0.0
    %545 = vmatpush1.msra.mxu0 0.0
    %546 = vmatprep.subr.mxu0 0.0
    %547 = vmatpush1.msra.mxu0 0.0
    %548 = vmatprep.subr.mxu0 0.0
    %549 = vmatpush1.msra.mxu0 0.0
    %550 = vmatprep.subr.mxu0 0.0
    %551 = vmatpush1.msra.mxu0 0.0
    %552 = vmatprep.subr.mxu0 0.0
    %553 = vmatpush1.msra.mxu0 0.0
    %554 = vmatprep.subr.mxu0 0.0
    %555 = vmatpush1.msra.mxu0 0.0
    %556 = vmatprep.subr.mxu0 0.0
    %557 = vmatpush1.msra.mxu0 0.0
    %558 = vmatprep.subr.mxu0 0.0
    %559 = vmatpush1.msra.mxu0 0.0
    %560 = vmatprep.subr.mxu0 0.0
    %561 = vmatpush1.msra.mxu0 0.0
    %562 = vmatprep.subr.mxu0 0.0
    %563 = vmatpush1.msra.mxu0 0.0
    %564 = vmatprep.subr.mxu0 0.0
    %565 = vmatpush1.msra.mxu0 0.0
    %566 = vmatprep.subr.mxu0 0.0
    %567 = vmatpush1.msra.mxu0 0.0
    %568 = vmatprep.subr.mxu0 0.0
    %569 = vmatpush1.msra.mxu0 0.0
    %570 = vmatprep.subr.mxu0 0.0
    %571 = vmatpush1.msra.mxu0 0.0
    %572 = vmatprep.subr.mxu0 0.0
    %573 = vmatpush1.msra.mxu0 0.0
    %574 = vmatprep.subr.mxu0 0.0
    %575 = vmatpush1.msra.mxu0 0.0
    %576 = vmatprep.subr.mxu0 0.0
    %577 = vmatpush1.msra.mxu0 0.0
    %578 = vmatprep.subr.mxu0 0.0
    %579 = vmatpush1.msra.mxu0 0.0
    %580 = vmatprep.subr.mxu0 0.0
    %581 = vmatpush1.msra.mxu0 0.0
    %582 = vmatprep.subr.mxu0 0.0
    %583 = vmatpush1.msra.mxu0 0.0
    %584 = vmatprep.subr.mxu0 0.0
    %585 = vmatpush1.msra.mxu0 0.0
    %586 = vmatprep.subr.mxu0 0.0
    %587 = vmatpush1.msra.mxu0 0.0
    %588 = vmatprep.subr.mxu0 0.0
    %589 = vmatpush1.msra.mxu0 0.0
    %590 = vmatprep.subr.mxu0 0.0
    %591 = vmatpush1.msra.mxu0 0.0
    %592 = vmatprep.mubr.f32.mxu0 0.0
    %593 = vmatmul.mubr.f32.gmra.mrb[0].mxu0 %v526
    %v594 = vpop.f32.mrb[0].mxu0
    %v595 = vadd.f32 0.0, %v594
    %v596 = vpop.f32.mrb[0].mxu0
    %597 = vdwg.mxu0
    %v599 = vsel %vm524, %v356, 0
    %601 = vmatprep.subr.mxu0 0.0
    %602 = vmatpush1.msra.mxu0 %v516
    %603 = vmatprep.subr.mxu0 0.0
    %604 = vmatpush1.msra.mxu0 %v517
    %605 = vmatprep.subr.mxu0 0.0
    %606 = vmatpush1.msra.mxu0 %v518
    %607 = vmatprep.subr.mxu0 0.0
    %608 = vmatpush1.msra.mxu0 %v519
    %609 = vmatprep.subr.mxu0 0.0
    %610 = vmatpush1.msra.mxu0 0.0
    %611 = vmatprep.subr.mxu0 0.0
    %612 = vmatpush1.msra.mxu0 0.0
    %613 = vmatprep.subr.mxu0 0.0
    %614 = vmatpush1.msra.mxu0 0.0
    %615 = vmatprep.subr.mxu0 0.0
    %616 = vmatpush1.msra.mxu0 0.0
    %617 = vmatprep.subr.mxu0 0.0
    %618 = vmatpush1.msra.mxu0 0.0
    %619 = vmatprep.subr.mxu0 0.0
    %620 = vmatpush1.msra.mxu0 0.0
    %621 = vmatprep.subr.mxu0 0.0
    %622 = vmatpush1.msra.mxu0 0.0
    %623 = vmatprep.subr.mxu0 0.0
    %624 = vmatpush1.msra.mxu0 0.0
    %625 = vmatprep.subr.mxu0 0.0
    %626 = vmatpush1.msra.mxu0 0.0
    %627 = vmatprep.subr.mxu0 0.0
    %628 = vmatpush1.msra.mxu0 0.0
    %629 = vmatprep.subr.mxu0 0.0
    %630 = vmatpush1.msra.mxu0 0.0
    %631 = vmatprep.subr.mxu0 0.0
    %632 = vmatpush1.msra.mxu0 0.0
    %633 = vmatprep.subr.mxu0 0.0
    %634 = vmatpush1.msra.mxu0 0.0
    %635 = vmatprep.subr.mxu0 0.0
    %636 = vmatpush1.msra.mxu0 0.0
    %637 = vmatprep.subr.mxu0 0.0
    %638 = vmatpush1.msra.mxu0 0.0
    %639 = vmatprep.subr.mxu0 0.0
    %640 = vmatpush1.msra.mxu0 0.0
    %641 = vmatprep.subr.mxu0 0.0
    %642 = vmatpush1.msra.mxu0 0.0
    %643 = vmatprep.subr.mxu0 0.0
    %644 = vmatpush1.msra.mxu0 0.0
    %645 = vmatprep.subr.mxu0 0.0
    %646 = vmatpush1.msra.mxu0 0.0
    %647 = vmatprep.subr.mxu0 0.0
    %648 = vmatpush1.msra.mxu0 0.0
    %649 = vmatprep.subr.mxu0 0.0
    %650 = vmatpush1.msra.mxu0 0.0
    %651 = vmatprep.subr.mxu0 0.0
    %652 = vmatpush1.msra.mxu0 0.0
    %653 = vmatprep.subr.mxu0 0.0
    %654 = vmatpush1.msra.mxu0 0.0
    %655 = vmatprep.subr.mxu0 0.0
    %656 = vmatpush1.msra.mxu0 0.0
    %657 = vmatprep.subr.mxu0 0.0
    %658 = vmatpush1.msra.mxu0 0.0
    %659 = vmatprep.subr.mxu0 0.0
    %660 = vmatpush1.msra.mxu0 0.0
    %661 = vmatprep.subr.mxu0 0.0
    %662 = vmatpush1.msra.mxu0 0.0
    %663 = vmatprep.subr.mxu0 0.0
    %664 = vmatpush1.msra.mxu0 0.0
    %665 = vmatprep.mubr.f32.mxu0 0.0
    %666 = vmatmul.mubr.f32.gmra.mrb[0].mxu0 %v599
    %v667 = vpop.f32.mrb[0].mxu0
    %v668 = vadd.f32 %v595, %v667
    %v669 = vpop.f32.mrb[0].mxu0
    %670 = vdwg.mxu0
    %v671 = vld [vmem:[%s3 + $0x110] sm:$0xff]
    %v672 = vld [vmem:[%s3 + $0x118] sm:$0xff]
    %v673 = vld [vmem:[%s3 + $0x120] sm:$0xff]
    %v674 = vld [vmem:[%s3 + $0x128] sm:$0xff]
    %v676 = vsel %vm524, %v515, 0
    %678 = vmatprep.subr.mxu0 0.0
    %679 = vmatpush1.msra.mxu0 %v671
    %680 = vmatprep.subr.mxu0 0.0
    %681 = vmatpush1.msra.mxu0 %v672
    %682 = vmatprep.subr.mxu0 0.0
    %683 = vmatpush1.msra.mxu0 %v673
    %684 = vmatprep.subr.mxu0 0.0
    %685 = vmatpush1.msra.mxu0 %v674
    %686 = vmatprep.subr.mxu0 0.0
    %687 = vmatpush1.msra.mxu0 0.0
    %688 = vmatprep.subr.mxu0 0.0
    %689 = vmatpush1.msra.mxu0 0.0
    %690 = vmatprep.subr.mxu0 0.0
    %691 = vmatpush1.msra.mxu0 0.0
    %692 = vmatprep.subr.mxu0 0.0
    %693 = vmatpush1.msra.mxu0 0.0
    %694 = vmatprep.subr.mxu0 0.0
    %695 = vmatpush1.msra.mxu0 0.0
    %696 = vmatprep.subr.mxu0 0.0
    %697 = vmatpush1.msra.mxu0 0.0
    %698 = vmatprep.subr.mxu0 0.0
    %699 = vmatpush1.msra.mxu0 0.0
    %700 = vmatprep.subr.mxu0 0.0
    %701 = vmatpush1.msra.mxu0 0.0
    %702 = vmatprep.subr.mxu0 0.0
    %703 = vmatpush1.msra.mxu0 0.0
    %704 = vmatprep.subr.mxu0 0.0
    %705 = vmatpush1.msra.mxu0 0.0
    %706 = vmatprep.subr.mxu0 0.0
    %707 = vmatpush1.msra.mxu0 0.0
    %708 = vmatprep.subr.mxu0 0.0
    %709 = vmatpush1.msra.mxu0 0.0
    %710 = vmatprep.subr.mxu0 0.0
    %711 = vmatpush1.msra.mxu0 0.0
    %712 = vmatprep.subr.mxu0 0.0
    %713 = vmatpush1.msra.mxu0 0.0
    %714 = vmatprep.subr.mxu0 0.0
    %715 = vmatpush1.msra.mxu0 0.0
    %716 = vmatprep.subr.mxu0 0.0
    %717 = vmatpush1.msra.mxu0 0.0
    %718 = vmatprep.subr.mxu0 0.0
    %719 = vmatpush1.msra.mxu0 0.0
    %720 = vmatprep.subr.mxu0 0.0
    %721 = vmatpush1.msra.mxu0 0.0
    %722 = vmatprep.subr.mxu0 0.0
    %723 = vmatpush1.msra.mxu0 0.0
    %724 = vmatprep.subr.mxu0 0.0
    %725 = vmatpush1.msra.mxu0 0.0
    %726 = vmatprep.subr.mxu0 0.0
    %727 = vmatpush1.msra.mxu0 0.0
    %728 = vmatprep.subr.mxu0 0.0
    %729 = vmatpush1.msra.mxu0 0.0
    %730 = vmatprep.subr.mxu0 0.0
    %731 = vmatpush1.msra.mxu0 0.0
    %732 = vmatprep.subr.mxu0 0.0
    %733 = vmatpush1.msra.mxu0 0.0
    %734 = vmatprep.subr.mxu0 0.0
    %735 = vmatpush1.msra.mxu0 0.0
    %736 = vmatprep.subr.mxu0 0.0
    %737 = vmatpush1.msra.mxu0 0.0
    %738 = vmatprep.subr.mxu0 0.0
    %739 = vmatpush1.msra.mxu0 0.0
    %740 = vmatprep.subr.mxu0 0.0
    %741 = vmatpush1.msra.mxu0 0.0
    %742 = vmatprep.mubr.f32.mxu0 0.0
    %743 = vmatmul.mubr.f32.gmra.mrb[0].mxu0 %v676
    %v744 = vpop.f32.mrb[0].mxu0
    %v745 = vadd.f32 0.0, %v744
    %v746 = vpop.f32.mrb[0].mxu0
    %747 = vdwg.mxu0
    %v748 = vadd.f32 %v668, %v745
    %v749 = vld [vmem:[%s3 + $0x22d] sm:$0x1]
    %v750 = vlaneseq
    %v751 = vshrl.u32 %v750, 7
    %v752 = vsub.s32 0, %v751
    %v753 = vrot.slane %v749, %v752
    %v754 = vadd.f32 %v748, %v753
    %v755 = vmax.f32 %v754, 0.0
    %v756 = vld [vmem:[%s3 + $0x130] sm:$0xff]
    %v757 = vld [vmem:[%s3 + $0x138] sm:$0xff]
    %v758 = vld [vmem:[%s3 + $0x140] sm:$0xff]
    %v759 = vld [vmem:[%s3 + $0x148] sm:$0xff]
    %v760 = vld [vmem:[%s3 + $0x22e] sm:$0x1]
    %v761 = vlaneseq
    %v762 = vshrl.u32 %v761, 7
    %v763 = vsub.s32 0, %v762
    %v764 = vrot.slane %v760, %v763
    %v766 = vsel %vm524, %v755, 0
    %768 = vmatprep.subr.mxu0 0.0
    %769 = vmatpush1.msra.mxu0 %v756
    %770 = vmatprep.subr.mxu0 0.0
    %771 = vmatpush1.msra.mxu0 %v757
    %772 = vmatprep.subr.mxu0 0.0
    %773 = vmatpush1.msra.mxu0 %v758
    %774 = vmatprep.subr.mxu0 0.0
    %775 = vmatpush1.msra.mxu0 %v759
    %776 = vmatprep.subr.mxu0 0.0
    %777 = vmatpush1.msra.mxu0 0.0
    %778 = vmatprep.subr.mxu0 0.0
    %779 = vmatpush1.msra.mxu0 0.0
    %780 = vmatprep.subr.mxu0 0.0
    %781 = vmatpush1.msra.mxu0 0.0
    %782 = vmatprep.subr.mxu0 0.0
    %783 = vmatpush1.msra.mxu0 0.0
    %784 = vmatprep.subr.mxu0 0.0
    %785 = vmatpush1.msra.mxu0 0.0
    %786 = vmatprep.subr.mxu0 0.0
    %787 = vmatpush1.msra.mxu0 0.0
    %788 = vmatprep.subr.mxu0 0.0
    %789 = vmatpush1.msra.mxu0 0.0
    %790 = vmatprep.subr.mxu0 0.0
    %791 = vmatpush1.msra.mxu0 0.0
    %792 = vmatprep.subr.mxu0 0.0
    %793 = vmatpush1.msra.mxu0 0.0
    %794 = vmatprep.subr.mxu0 0.0
    %795 = vmatpush1.msra.mxu0 0.0
    %796 = vmatprep.subr.mxu0 0.0
    %797 = vmatpush1.msra.mxu0 0.0
    %798 = vmatprep.subr.mxu0 0.0
    %799 = vmatpush1.msra.mxu0 0.0
    %800 = vmatprep.subr.mxu0 0.0
    %801 = vmatpush1.msra.mxu0 0.0
    %802 = vmatprep.subr.mxu0 0.0
    %803 = vmatpush1.msra.mxu0 0.0
    %804 = vmatprep.subr.mxu0 0.0
    %805 = vmatpush1.msra.mxu0 0.0
    %806 = vmatprep.subr.mxu0 0.0
    %807 = vmatpush1.msra.mxu0 0.0
    %808 = vmatprep.subr.mxu0 0.0
    %809 = vmatpush1.msra.mxu0 0.0
    %810 = vmatprep.subr.mxu0 0.0
    %811 = vmatpush1.msra.mxu0 0.0
    %812 = vmatprep.subr.mxu0 0.0
    %813 = vmatpush1.msra.mxu0 0.0
    %814 = vmatprep.subr.mxu0 0.0
    %815 = vmatpush1.msra.mxu0 0.0
    %816 = vmatprep.subr.mxu0 0.0
    %817 = vmatpush1.msra.mxu0 0.0
    %818 = vmatprep.subr.mxu0 0.0
    %819 = vmatpush1.msra.mxu0 0.0
    %820 = vmatprep.subr.mxu0 0.0
    %821 = vmatpush1.msra.mxu0 0.0
    %822 = vmatprep.subr.mxu0 0.0
    %823 = vmatpush1.msra.mxu0 0.0
    %824 = vmatprep.subr.mxu0 0.0
    %825 = vmatpush1.msra.mxu0 0.0
    %826 = vmatprep.subr.mxu0 0.0
    %827 = vmatpush1.msra.mxu0 0.0
    %828 = vmatprep.subr.mxu0 0.0
    %829 = vmatpush1.msra.mxu0 0.0
    %830 = vmatprep.subr.mxu0 0.0
    %831 = vmatpush1.msra.mxu0 0.0
    %832 = vmatprep.mubr.f32.mxu0 0.0
    %833 = vmatmul.mubr.f32.gmra.mrb[0].mxu0 %v766
    %v834 = vpop.f32.mrb[0].mxu0
    %v835 = vadd.f32 %v764, %v834
    %v836 = vpop.f32.mrb[0].mxu0
    %837 = vdwg.mxu0
    %v838 = vxor.u32 %v835, 2147483648
    %v839 = vmul.f32 %v838, 1.442695
    %v840 = vpow.pop %v839
    %v841 = vadd.f32 %v840, 1.0
    %v842 = vrcp.pop %v841
    %v843 = vmul.f32 1.0, %v842
    %v844 = vld [vmem:[%s3 + $0x150] sm:$0xff]
    %v845 = vld [vmem:[%s3 + $0x158] sm:$0xff]
    %v846 = vld [vmem:[%s3 + $0x160] sm:$0xff]
    %v847 = vld [vmem:[%s3 + $0x168] sm:$0xff]
    %v848 = vld [vmem:[%s3 + $0x22f] sm:$0x1]
    %v849 = vlaneseq
    %v850 = vshrl.u32 %v849, 7
    %v851 = vsub.s32 0, %v850
    %v852 = vrot.slane %v848, %v851
    %853 = vmatprep.subr.mxu0 0.0
    %854 = vmatpush1.msra.mxu0 %v844
    %855 = vmatprep.subr.mxu0 0.0
    %856 = vmatpush1.msra.mxu0 %v845
    %857 = vmatprep.subr.mxu0 0.0
    %858 = vmatpush1.msra.mxu0 %v846
    %859 = vmatprep.subr.mxu0 0.0
    %860 = vmatpush1.msra.mxu0 %v847
    %861 = vmatprep.subr.mxu0 0.0
    %862 = vmatpush1.msra.mxu0 0.0
    %863 = vmatprep.subr.mxu0 0.0
    %864 = vmatpush1.msra.mxu0 0.0
    %865 = vmatprep.subr.mxu0 0.0
    %866 = vmatpush1.msra.mxu0 0.0
    %867 = vmatprep.subr.mxu0 0.0
    %868 = vmatpush1.msra.mxu0 0.0
    %869 = vmatprep.subr.mxu0 0.0
    %870 = vmatpush1.msra.mxu0 0.0
    %871 = vmatprep.subr.mxu0 0.0
    %872 = vmatpush1.msra.mxu0 0.0
    %873 = vmatprep.subr.mxu0 0.0
    %874 = vmatpush1.msra.mxu0 0.0
    %875 = vmatprep.subr.mxu0 0.0
    %876 = vmatpush1.msra.mxu0 0.0
    %877 = vmatprep.subr.mxu0 0.0
    %878 = vmatpush1.msra.mxu0 0.0
    %879 = vmatprep.subr.mxu0 0.0
    %880 = vmatpush1.msra.mxu0 0.0
    %881 = vmatprep.subr.mxu0 0.0
    %882 = vmatpush1.msra.mxu0 0.0
    %883 = vmatprep.subr.mxu0 0.0
    %884 = vmatpush1.msra.mxu0 0.0
    %885 = vmatprep.subr.mxu0 0.0
    %886 = vmatpush1.msra.mxu0 0.0
    %887 = vmatprep.subr.mxu0 0.0
    %888 = vmatpush1.msra.mxu0 0.0
    %889 = vmatprep.subr.mxu0 0.0
    %890 = vmatpush1.msra.mxu0 0.0
    %891 = vmatprep.subr.mxu0 0.0
    %892 = vmatpush1.msra.mxu0 0.0
    %893 = vmatprep.subr.mxu0 0.0
    %894 = vmatpush1.msra.mxu0 0.0
    %895 = vmatprep.subr.mxu0 0.0
    %896 = vmatpush1.msra.mxu0 0.0
    %897 = vmatprep.subr.mxu0 0.0
    %898 = vmatpush1.msra.mxu0 0.0
    %899 = vmatprep.subr.mxu0 0.0
    %900 = vmatpush1.msra.mxu0 0.0
    %901 = vmatprep.subr.mxu0 0.0
    %902 = vmatpush1.msra.mxu0 0.0
    %903 = vmatprep.subr.mxu0 0.0
    %904 = vmatpush1.msra.mxu0 0.0
    %905 = vmatprep.subr.mxu0 0.0
    %906 = vmatpush1.msra.mxu0 0.0
    %907 = vmatprep.subr.mxu0 0.0
    %908 = vmatpush1.msra.mxu0 0.0
    %909 = vmatprep.subr.mxu0 0.0
    %910 = vmatpush1.msra.mxu0 0.0
    %911 = vmatprep.subr.mxu0 0.0
    %912 = vmatpush1.msra.mxu0 0.0
    %913 = vmatprep.subr.mxu0 0.0
    %914 = vmatpush1.msra.mxu0 0.0
    %915 = vmatprep.subr.mxu0 0.0
    %916 = vmatpush1.msra.mxu0 0.0
    %917 = vmatprep.mubr.f32.mxu0 0.0
    %918 = vmatmul.mubr.f32.gmra.mrb[0].mxu0 %v766
    %v919 = vpop.f32.mrb[0].mxu0
    %v920 = vadd.f32 %v852, %v919
    %v921 = vpop.f32.mrb[0].mxu0
    %922 = vdwg.mxu0
    %v923 = vtanh.pop %v920
    %v924 = vld [vmem:[%s3 + $0x170] sm:$0xff]
    %v925 = vld [vmem:[%s3 + $0x178] sm:$0xff]
    %v926 = vld [vmem:[%s3 + $0x180] sm:$0xff]
    %v927 = vld [vmem:[%s3 + $0x188] sm:$0xff]
    %v928 = vld [vmem:[%s3 + $0x230] sm:$0x1]
    %v929 = vlaneseq
    %v930 = vshrl.u32 %v929, 7
    %v931 = vsub.s32 0, %v930
    %v932 = vrot.slane %v928, %v931
    %933 = vmatprep.subr.mxu0 0.0
    %934 = vmatpush1.msra.mxu0 %v924
    %935 = vmatprep.subr.mxu0 0.0
    %936 = vmatpush1.msra.mxu0 %v925
    %937 = vmatprep.subr.mxu0 0.0
    %938 = vmatpush1.msra.mxu0 %v926
    %939 = vmatprep.subr.mxu0 0.0
    %940 = vmatpush1.msra.mxu0 %v927
    %941 = vmatprep.subr.mxu0 0.0
    %942 = vmatpush1.msra.mxu0 0.0
    %943 = vmatprep.subr.mxu0 0.0
    %944 = vmatpush1.msra.mxu0 0.0
    %945 = vmatprep.subr.mxu0 0.0
    %946 = vmatpush1.msra.mxu0 0.0
    %947 = vmatprep.subr.mxu0 0.0
    %948 = vmatpush1.msra.mxu0 0.0
    %949 = vmatprep.subr.mxu0 0.0
    %950 = vmatpush1.msra.mxu0 0.0
    %951 = vmatprep.subr.mxu0 0.0
    %952 = vmatpush1.msra.mxu0 0.0
    %953 = vmatprep.subr.mxu0 0.0
    %954 = vmatpush1.msra.mxu0 0.0
    %955 = vmatprep.subr.mxu0 0.0
    %956 = vmatpush1.msra.mxu0 0.0
    %957 = vmatprep.subr.mxu0 0.0
    %958 = vmatpush1.msra.mxu0 0.0
    %959 = vmatprep.subr.mxu0 0.0
    %960 = vmatpush1.msra.mxu0 0.0
    %961 = vmatprep.subr.mxu0 0.0
    %962 = vmatpush1.msra.mxu0 0.0
    %963 = vmatprep.subr.mxu0 0.0
    %964 = vmatpush1.msra.mxu0 0.0
    %965 = vmatprep.subr.mxu0 0.0
    %966 = vmatpush1.msra.mxu0 0.0
    %967 = vmatprep.subr.mxu0 0.0
    %968 = vmatpush1.msra.mxu0 0.0
    %969 = vmatprep.subr.mxu0 0.0
    %970 = vmatpush1.msra.mxu0 0.0
    %971 = vmatprep.subr.mxu0 0.0
    %972 = vmatpush1.msra.mxu0 0.0
    %973 = vmatprep.subr.mxu0 0.0
    %974 = vmatpush1.msra.mxu0 0.0
    %975 = vmatprep.subr.mxu0 0.0
    %976 = vmatpush1.msra.mxu0 0.0
    %977 = vmatprep.subr.mxu0 0.0
    %978 = vmatpush1.msra.mxu0 0.0
    %979 = vmatprep.subr.mxu0 0.0
    %980 = vmatpush1.msra.mxu0 0.0
    %981 = vmatprep.subr.mxu0 0.0
    %982 = vmatpush1.msra.mxu0 0.0
    %983 = vmatprep.subr.mxu0 0.0
    %984 = vmatpush1.msra.mxu0 0.0
    %985 = vmatprep.subr.mxu0 0.0
    %986 = vmatpush1.msra.mxu0 0.0
    %987 = vmatprep.subr.mxu0 0.0
    %988 = vmatpush1.msra.mxu0 0.0
    %989 = vmatprep.subr.mxu0 0.0
    %990 = vmatpush1.msra.mxu0 0.0
    %991 = vmatprep.subr.mxu0 0.0
    %992 = vmatpush1.msra.mxu0 0.0
    %993 = vmatprep.subr.mxu0 0.0
    %994 = vmatpush1.msra.mxu0 0.0
    %995 = vmatprep.subr.mxu0 0.0
    %996 = vmatpush1.msra.mxu0 0.0
    %997 = vmatprep.mubr.f32.mxu0 0.0
    %998 = vmatmul.mubr.f32.gmra.mrb[0].mxu0 %v766
    %v999 = vpop.f32.mrb[0].mxu0
    %v1000 = vadd.f32 %v932, %v999
    %v1001 = vpop.f32.mrb[0].mxu0
    %1002 = vdwg.mxu0
    %v1003 = vxor.u32 %v1000, 2147483648
    %v1004 = vmul.f32 %v1003, 1.442695
    %v1005 = vpow.pop %v1004
    %v1006 = vadd.f32 %v1005, 1.0
    %v1007 = vrcp.pop %v1006
    %v1008 = vmul.f32 1.0, %v1007
    %v1009 = vmul.f32 %v843, %v923
    %v1010 = vtanh.pop %v1009
    %v1011 = vmul.f32 %v1008, %v1010
    %v1012 = vld [vmem:[%s3 + $0x190] sm:$0xff]
    %v1013 = vld [vmem:[%s3 + $0x198] sm:$0xff]
    %v1014 = vld [vmem:[%s3 + $0x1a0] sm:$0xff]
    %v1015 = vld [vmem:[%s3 + $0x1a8] sm:$0xff]
    %v1016 = vld [vmem:[%s3 + $0x1b0] sm:$0xff]
    %v1017 = vld [vmem:[%s3 + $0x1b8] sm:$0xff]
    %v1018 = vld [vmem:[%s3 + $0x1c0] sm:$0xff]
    %v1019 = vld [vmem:[%s3 + $0x1c8] sm:$0xff]
    %v1020 = vld [vmem:[%s3 + $0x231] sm:$0x1]
    %v1021 = vlaneseq
    %v1022 = vshrl.u32 %v1021, 7
    %v1023 = vsub.s32 0, %v1022
    %v1024 = vrot.slane %v1020, %v1023
    %v1026 = vsel %vm34, %v1011, 0
    %1028 = vmatprep.subr.mxu0 0.0
    %1029 = vmatpush1.msra.mxu0 %v1012
    %1030 = vmatprep.subr.mxu0 0.0
    %1031 = vmatpush1.msra.mxu0 %v1013
    %1032 = vmatprep.subr.mxu0 0.0
    %1033 = vmatpush1.msra.mxu0 %v1014
    %1034 = vmatprep.subr.mxu0 0.0
    %1035 = vmatpush1.msra.mxu0 %v1015
    %1036 = vmatprep.subr.mxu0 0.0
    %1037 = vmatpush1.msra.mxu0 %v1016
    %1038 = vmatprep.subr.mxu0 0.0
    %1039 = vmatpush1.msra.mxu0 %v1017
    %1040 = vmatprep.subr.mxu0 0.0
    %1041 = vmatpush1.msra.mxu0 %v1018
    %1042 = vmatprep.subr.mxu0 0.0
    %1043 = vmatpush1.msra.mxu0 %v1019
    %1044 = vmatprep.subr.mxu0 0.0
    %1045 = vmatpush1.msra.mxu0 0.0
    %1046 = vmatprep.subr.mxu0 0.0
    %1047 = vmatpush1.msra.mxu0 0.0
    %1048 = vmatprep.subr.mxu0 0.0
    %1049 = vmatpush1.msra.mxu0 0.0
    %1050 = vmatprep.subr.mxu0 0.0
    %1051 = vmatpush1.msra.mxu0 0.0
    %1052 = vmatprep.subr.mxu0 0.0
    %1053 = vmatpush1.msra.mxu0 0.0
    %1054 = vmatprep.subr.mxu0 0.0
    %1055 = vmatpush1.msra.mxu0 0.0
    %1056 = vmatprep.subr.mxu0 0.0
    %1057 = vmatpush1.msra.mxu0 0.0
    %1058 = vmatprep.subr.mxu0 0.0
    %1059 = vmatpush1.msra.mxu0 0.0
    %1060 = vmatprep.subr.mxu0 0.0
    %1061 = vmatpush1.msra.mxu0 0.0
    %1062 = vmatprep.subr.mxu0 0.0
    %1063 = vmatpush1.msra.mxu0 0.0
    %1064 = vmatprep.subr.mxu0 0.0
    %1065 = vmatpush1.msra.mxu0 0.0
    %1066 = vmatprep.subr.mxu0 0.0
    %1067 = vmatpush1.msra.mxu0 0.0
    %1068 = vmatprep.subr.mxu0 0.0
    %1069 = vmatpush1.msra.mxu0 0.0
    %1070 = vmatprep.subr.mxu0 0.0
    %1071 = vmatpush1.msra.mxu0 0.0
    %1072 = vmatprep.subr.mxu0 0.0
    %1073 = vmatpush1.msra.mxu0 0.0
    %1074 = vmatprep.subr.mxu0 0.0
    %1075 = vmatpush1.msra.mxu0 0.0
    %1076 = vmatprep.subr.mxu0 0.0
    %1077 = vmatpush1.msra.mxu0 0.0
    %1078 = vmatprep.subr.mxu0 0.0
    %1079 = vmatpush1.msra.mxu0 0.0
    %1080 = vmatprep.subr.mxu0 0.0
    %1081 = vmatpush1.msra.mxu0 0.0
    %1082 = vmatprep.subr.mxu0 0.0
    %1083 = vmatpush1.msra.mxu0 0.0
    %1084 = vmatprep.subr.mxu0 0.0
    %1085 = vmatpush1.msra.mxu0 0.0
    %1086 = vmatprep.subr.mxu0 0.0
    %1087 = vmatpush1.msra.mxu0 0.0
    %1088 = vmatprep.subr.mxu0 0.0
    %1089 = vmatpush1.msra.mxu0 0.0
    %1090 = vmatprep.subr.mxu0 0.0
    %1091 = vmatpush1.msra.mxu0 0.0
    %1092 = vmatprep.mubr.f32.mxu0 0.0
    %1093 = vmatmul.mubr.f32.gmra.mrb[0].mxu0 %v1026
    %v1094 = vpop.f32.mrb[0].mxu0
    %v1095 = vadd.f32 %v1024, %v1094
    %v1096 = vpop.f32.mrb[0].mxu0
    %1097 = vdwg.mxu0
    %v1098 = vmax.f32 %v1095, 0.0
    %v1099 = vld [vmem:[%s3 + $0x1d0] sm:$0xff]
    %v1100 = vld [vmem:[%s3 + $0x1d8] sm:$0xff]
    %v1101 = vld [vmem:[%s3 + $0x1e0] sm:$0xff]
    %v1102 = vld [vmem:[%s3 + $0x1e8] sm:$0xff]
    %v1103 = vld [vmem:[%s3 + $0x232] sm:$0x1]
    %v1104 = vlaneseq
    %v1105 = vshrl.u32 %v1104, 7
    %v1106 = vsub.s32 0, %v1105
    %v1107 = vrot.slane %v1103, %v1106
    %v1109 = vsel %vm524, %v1098, 0
    %1111 = vmatprep.subr.mxu0 0.0
    %1112 = vmatpush1.msra.mxu0 %v1099
    %1113 = vmatprep.subr.mxu0 0.0
    %1114 = vmatpush1.msra.mxu0 %v1100
    %1115 = vmatprep.subr.mxu0 0.0
    %1116 = vmatpush1.msra.mxu0 %v1101
    %1117 = vmatprep.subr.mxu0 0.0
    %1118 = vmatpush1.msra.mxu0 %v1102
    %1119 = vmatprep.subr.mxu0 0.0
    %1120 = vmatpush1.msra.mxu0 0.0
    %1121 = vmatprep.subr.mxu0 0.0
    %1122 = vmatpush1.msra.mxu0 0.0
    %1123 = vmatprep.subr.mxu0 0.0
    %1124 = vmatpush1.msra.mxu0 0.0
    %1125 = vmatprep.subr.mxu0 0.0
    %1126 = vmatpush1.msra.mxu0 0.0
    %1127 = vmatprep.subr.mxu0 0.0
    %1128 = vmatpush1.msra.mxu0 0.0
    %1129 = vmatprep.subr.mxu0 0.0
    %1130 = vmatpush1.msra.mxu0 0.0
    %1131 = vmatprep.subr.mxu0 0.0
    %1132 = vmatpush1.msra.mxu0 0.0
    %1133 = vmatprep.subr.mxu0 0.0
    %1134 = vmatpush1.msra.mxu0 0.0
    %1135 = vmatprep.subr.mxu0 0.0
    %1136 = vmatpush1.msra.mxu0 0.0
    %1137 = vmatprep.subr.mxu0 0.0
    %1138 = vmatpush1.msra.mxu0 0.0
    %1139 = vmatprep.subr.mxu0 0.0
    %1140 = vmatpush1.msra.mxu0 0.0
    %1141 = vmatprep.subr.mxu0 0.0
    %1142 = vmatpush1.msra.mxu0 0.0
    %1143 = vmatprep.subr.mxu0 0.0
    %1144 = vmatpush1.msra.mxu0 0.0
    %1145 = vmatprep.subr.mxu0 0.0
    %1146 = vmatpush1.msra.mxu0 0.0
    %1147 = vmatprep.subr.mxu0 0.0
    %1148 = vmatpush1.msra.mxu0 0.0
    %1149 = vmatprep.subr.mxu0 0.0
    %1150 = vmatpush1.msra.mxu0 0.0
    %1151 = vmatprep.subr.mxu0 0.0
    %1152 = vmatpush1.msra.mxu0 0.0
    %1153 = vmatprep.subr.mxu0 0.0
    %1154 = vmatpush1.msra.mxu0 0.0
    %1155 = vmatprep.subr.mxu0 0.0
    %1156 = vmatpush1.msra.mxu0 0.0
    %1157 = vmatprep.subr.mxu0 0.0
    %1158 = vmatpush1.msra.mxu0 0.0
    %1159 = vmatprep.subr.mxu0 0.0
    %1160 = vmatpush1.msra.mxu0 0.0
    %1161 = vmatprep.subr.mxu0 0.0
    %1162 = vmatpush1.msra.mxu0 0.0
    %1163 = vmatprep.subr.mxu0 0.0
    %1164 = vmatpush1.msra.mxu0 0.0
    %1165 = vmatprep.subr.mxu0 0.0
    %1166 = vmatpush1.msra.mxu0 0.0
    %1167 = vmatprep.subr.mxu0 0.0
    %1168 = vmatpush1.msra.mxu0 0.0
    %1169 = vmatprep.subr.mxu0 0.0
    %1170 = vmatpush1.msra.mxu0 0.0
    %1171 = vmatprep.subr.mxu0 0.0
    %1172 = vmatpush1.msra.mxu0 0.0
    %1173 = vmatprep.subr.mxu0 0.0
    %1174 = vmatpush1.msra.mxu0 0.0
    %1175 = vmatprep.mubr.f32.mxu0 0.0
    %1176 = vmatmul.mubr.f32.gmra.mrb[0].mxu0 %v1109
    %v1177 = vpop.f32.mrb[0].mxu0
    %v1178 = vadd.f32 %v1107, %v1177
    %v1179 = vpop.f32.mrb[0].mxu0
    %1180 = vdwg.mxu0
    %v1181 = vsub.f32 %v1178, %v19
    %v1182 = vld [vmem:[%s3 + $0x1f0] sm:$0xff]
    %v1183 = vld [vmem:[%s3 + $0x233] sm:$0x1]
    %v1184 = vlaneseq
    %v1185 = vshrl.u32 %v1184, 7
    %v1186 = vsub.s32 0, %v1185
    %v1187 = vrot.slane %v1183, %v1186
    %v1189 = vsel %vm282, %v1181, 0
    %1191 = vmatprep.subr.mxu0 0.0
    %1192 = vmatpush1.msra.mxu0 %v1182
    %1193 = vmatprep.subr.mxu0 0.0
    %1194 = vmatpush1.msra.mxu0 0.0
    %1195 = vmatprep.subr.mxu0 0.0
    %1196 = vmatpush1.msra.mxu0 0.0
    %1197 = vmatprep.subr.mxu0 0.0
    %1198 = vmatpush1.msra.mxu0 0.0
    %1199 = vmatprep.subr.mxu0 0.0
    %1200 = vmatpush1.msra.mxu0 0.0
    %1201 = vmatprep.subr.mxu0 0.0
    %1202 = vmatpush1.msra.mxu0 0.0
    %1203 = vmatprep.subr.mxu0 0.0
    %1204 = vmatpush1.msra.mxu0 0.0
    %1205 = vmatprep.subr.mxu0 0.0
    %1206 = vmatpush1.msra.mxu0 0.0
    %1207 = vmatprep.subr.mxu0 0.0
    %1208 = vmatpush1.msra.mxu0 0.0
    %1209 = vmatprep.subr.mxu0 0.0
    %1210 = vmatpush1.msra.mxu0 0.0
    %1211 = vmatprep.subr.mxu0 0.0
    %1212 = vmatpush1.msra.mxu0 0.0
    %1213 = vmatprep.subr.mxu0 0.0
    %1214 = vmatpush1.msra.mxu0 0.0
    %1215 = vmatprep.subr.mxu0 0.0
    %1216 = vmatpush1.msra.mxu0 0.0
    %1217 = vmatprep.subr.mxu0 0.0
    %1218 = vmatpush1.msra.mxu0 0.0
    %1219 = vmatprep.subr.mxu0 0.0
    %1220 = vmatpush1.msra.mxu0 0.0
    %1221 = vmatprep.subr.mxu0 0.0
    %1222 = vmatpush1.msra.mxu0 0.0
    %1223 = vmatprep.subr.mxu0 0.0
    %1224 = vmatpush1.msra.mxu0 0.0
    %1225 = vmatprep.subr.mxu0 0.0
    %1226 = vmatpush1.msra.mxu0 0.0
    %1227 = vmatprep.subr.mxu0 0.0
    %1228 = vmatpush1.msra.mxu0 0.0
    %1229 = vmatprep.subr.mxu0 0.0
    %1230 = vmatpush1.msra.mxu0 0.0
    %1231 = vmatprep.subr.mxu0 0.0
    %1232 = vmatpush1.msra.mxu0 0.0
    %1233 = vmatprep.subr.mxu0 0.0
    %1234 = vmatpush1.msra.mxu0 0.0
    %1235 = vmatprep.subr.mxu0 0.0
    %1236 = vmatpush1.msra.mxu0 0.0
    %1237 = vmatprep.subr.mxu0 0.0
    %1238 = vmatpush1.msra.mxu0 0.0
    %1239 = vmatprep.subr.mxu0 0.0
    %1240 = vmatpush1.msra.mxu0 0.0
    %1241 = vmatprep.subr.mxu0 0.0
    %1242 = vmatpush1.msra.mxu0 0.0
    %1243 = vmatprep.subr.mxu0 0.0
    %1244 = vmatpush1.msra.mxu0 0.0
    %1245 = vmatprep.subr.mxu0 0.0
    %1246 = vmatpush1.msra.mxu0 0.0
    %1247 = vmatprep.subr.mxu0 0.0
    %1248 = vmatpush1.msra.mxu0 0.0
    %1249 = vmatprep.subr.mxu0 0.0
    %1250 = vmatpush1.msra.mxu0 0.0
    %1251 = vmatprep.subr.mxu0 0.0
    %1252 = vmatpush1.msra.mxu0 0.0
    %1253 = vmatprep.subr.mxu0 0.0
    %1254 = vmatpush1.msra.mxu0 0.0
    %1255 = vmatprep.mubr.f32.mxu0 0.0
    %1256 = vmatmul.mubr.f32.gmra.mrb[0].mxu0 %v1189
    %v1257 = vpop.f32.mrb[0].mxu0
    %v1258 = vadd.f32 %v1187, %v1257
    %v1259 = vpop.f32.mrb[0].mxu0
    %1260 = vdwg.mxu0
    %v1261 = vmax.f32 %v1258, 0.0
    %v1262 = vld [vmem:[%s3 + $0x1f8] sm:$0xff]
    %v1263 = vld [vmem:[%s3 + $0x200] sm:$0xff]
    %v1264 = vld [vmem:[%s3 + $0x208] sm:$0xff]
    %v1265 = vld [vmem:[%s3 + $0x234] sm:$0x1]
    %v1266 = vlaneseq
    %v1267 = vshrl.u32 %v1266, 7
    %v1268 = vsub.s32 0, %v1267
    %v1269 = vrot.slane %v1265, %v1268
    %vm1270 = vcmask 195584
    %v1272 = vsel %vm1270, %v1261, 0
    %1274 = vmatprep.subr.mxu0 0.0
    %1275 = vmatpush1.msra.mxu0 %v1262
    %1276 = vmatprep.subr.mxu0 0.0
    %1277 = vmatpush1.msra.mxu0 %v1263
    %1278 = vmatprep.subr.mxu0 0.0
    %1279 = vmatpush1.msra.mxu0 %v1264
    %1280 = vmatprep.subr.mxu0 0.0
    %1281 = vmatpush1.msra.mxu0 0.0
    %1282 = vmatprep.subr.mxu0 0.0
    %1283 = vmatpush1.msra.mxu0 0.0
    %1284 = vmatprep.subr.mxu0 0.0
    %1285 = vmatpush1.msra.mxu0 0.0
    %1286 = vmatprep.subr.mxu0 0.0
    %1287 = vmatpush1.msra.mxu0 0.0
    %1288 = vmatprep.subr.mxu0 0.0
    %1289 = vmatpush1.msra.mxu0 0.0
    %1290 = vmatprep.subr.mxu0 0.0
    %1291 = vmatpush1.msra.mxu0 0.0
    %1292 = vmatprep.subr.mxu0 0.0
    %1293 = vmatpush1.msra.mxu0 0.0
    %1294 = vmatprep.subr.mxu0 0.0
    %1295 = vmatpush1.msra.mxu0 0.0
    %1296 = vmatprep.subr.mxu0 0.0
    %1297 = vmatpush1.msra.mxu0 0.0
    %1298 = vmatprep.subr.mxu0 0.0
    %1299 = vmatpush1.msra.mxu0 0.0
    %1300 = vmatprep.subr.mxu0 0.0
    %1301 = vmatpush1.msra.mxu0 0.0
    %1302 = vmatprep.subr.mxu0 0.0
    %1303 = vmatpush1.msra.mxu0 0.0
    %1304 = vmatprep.subr.mxu0 0.0
    %1305 = vmatpush1.msra.mxu0 0.0
    %1306 = vmatprep.subr.mxu0 0.0
    %1307 = vmatpush1.msra.mxu0 0.0
    %1308 = vmatprep.subr.mxu0 0.0
    %1309 = vmatpush1.msra.mxu0 0.0
    %1310 = vmatprep.subr.mxu0 0.0
    %1311 = vmatpush1.msra.mxu0 0.0
    %1312 = vmatprep.subr.mxu0 0.0
    %1313 = vmatpush1.msra.mxu0 0.0
    %1314 = vmatprep.subr.mxu0 0.0
    %1315 = vmatpush1.msra.mxu0 0.0
    %1316 = vmatprep.subr.mxu0 0.0
    %1317 = vmatpush1.msra.mxu0 0.0
    %1318 = vmatprep.subr.mxu0 0.0
    %1319 = vmatpush1.msra.mxu0 0.0
    %1320 = vmatprep.subr.mxu0 0.0
    %1321 = vmatpush1.msra.mxu0 0.0
    %1322 = vmatprep.subr.mxu0 0.0
    %1323 = vmatpush1.msra.mxu0 0.0
    %1324 = vmatprep.subr.mxu0 0.0
    %1325 = vmatpush1.msra.mxu0 0.0
    %1326 = vmatprep.subr.mxu0 0.0
    %1327 = vmatpush1.msra.mxu0 0.0
    %1328 = vmatprep.subr.mxu0 0.0
    %1329 = vmatpush1.msra.mxu0 0.0
    %1330 = vmatprep.subr.mxu0 0.0
    %1331 = vmatpush1.msra.mxu0 0.0
    %1332 = vmatprep.subr.mxu0 0.0
    %1333 = vmatpush1.msra.mxu0 0.0
    %1334 = vmatprep.subr.mxu0 0.0
    %1335 = vmatpush1.msra.mxu0 0.0
    %1336 = vmatprep.subr.mxu0 0.0
    %1337 = vmatpush1.msra.mxu0 0.0
    %1338 = vmatprep.mubr.f32.mxu0 0.0
    %1339 = vmatmul.mubr.f32.gmra.mrb[0].mxu0 %v1272
    %v1340 = vpop.f32.mrb[0].mxu0
    %v1341 = vadd.f32 %v1269, %v1340
    %v1342 = vpop.f32.mrb[0].mxu0
    %1343 = vdwg.mxu0
    %v1344 = vmax.f32 %v1341, 0.0
    %v1345 = vadd.f32 %v1344, %v19
    %v1346 = vld [vmem:[%s3 + $0x210] sm:$0xff]
    %v1347 = vld [vmem:[%s3 + $0x235] sm:$0x1]
    %v1348 = vlaneseq
    %v1349 = vshrl.u32 %v1348, 7
    %v1350 = vsub.s32 0, %v1349
    %v1351 = vrot.slane %v1347, %v1350
    %v1353 = vsel %vm282, %v1345, 0
    %1355 = vmatprep.subr.mxu0 0.0
    %1356 = vmatpush1.msra.mxu0 %v1346
    %1357 = vmatprep.subr.mxu0 0.0
    %1358 = vmatpush1.msra.mxu0 0.0
    %1359 = vmatprep.subr.mxu0 0.0
    %1360 = vmatpush1.msra.mxu0 0.0
    %1361 = vmatprep.subr.mxu0 0.0
    %1362 = vmatpush1.msra.mxu0 0.0
    %1363 = vmatprep.subr.mxu0 0.0
    %1364 = vmatpush1.msra.mxu0 0.0
    %1365 = vmatprep.subr.mxu0 0.0
    %1366 = vmatpush1.msra.mxu0 0.0
    %1367 = vmatprep.subr.mxu0 0.0
    %1368 = vmatpush1.msra.mxu0 0.0
    %1369 = vmatprep.subr.mxu0 0.0
    %1370 = vmatpush1.msra.mxu0 0.0
    %1371 = vmatprep.subr.mxu0 0.0
    %1372 = vmatpush1.msra.mxu0 0.0
    %1373 = vmatprep.subr.mxu0 0.0
    %1374 = vmatpush1.msra.mxu0 0.0
    %1375 = vmatprep.subr.mxu0 0.0
    %1376 = vmatpush1.msra.mxu0 0.0
    %1377 = vmatprep.subr.mxu0 0.0
    %1378 = vmatpush1.msra.mxu0 0.0
    %1379 = vmatprep.subr.mxu0 0.0
    %1380 = vmatpush1.msra.mxu0 0.0
    %1381 = vmatprep.subr.mxu0 0.0
    %1382 = vmatpush1.msra.mxu0 0.0
    %1383 = vmatprep.subr.mxu0 0.0
    %1384 = vmatpush1.msra.mxu0 0.0
    %1385 = vmatprep.subr.mxu0 0.0
    %1386 = vmatpush1.msra.mxu0 0.0
    %1387 = vmatprep.subr.mxu0 0.0
    %1388 = vmatpush1.msra.mxu0 0.0
    %1389 = vmatprep.subr.mxu0 0.0
    %1390 = vmatpush1.msra.mxu0 0.0
    %1391 = vmatprep.subr.mxu0 0.0
    %1392 = vmatpush1.msra.mxu0 0.0
    %1393 = vmatprep.subr.mxu0 0.0
    %1394 = vmatpush1.msra.mxu0 0.0
    %1395 = vmatprep.subr.mxu0 0.0
    %1396 = vmatpush1.msra.mxu0 0.0
    %1397 = vmatprep.subr.mxu0 0.0
    %1398 = vmatpush1.msra.mxu0 0.0
    %1399 = vmatprep.subr.mxu0 0.0
    %1400 = vmatpush1.msra.mxu0 0.0
    %1401 = vmatprep.subr.mxu0 0.0
    %1402 = vmatpush1.msra.mxu0 0.0
    %1403 = vmatprep.subr.mxu0 0.0
    %1404 = vmatpush1.msra.mxu0 0.0
    %1405 = vmatprep.subr.mxu0 0.0
    %1406 = vmatpush1.msra.mxu0 0.0
    %1407 = vmatprep.subr.mxu0 0.0
    %1408 = vmatpush1.msra.mxu0 0.0
    %1409 = vmatprep.subr.mxu0 0.0
    %1410 = vmatpush1.msra.mxu0 0.0
    %1411 = vmatprep.subr.mxu0 0.0
    %1412 = vmatpush1.msra.mxu0 0.0
    %1413 = vmatprep.subr.mxu0 0.0
    %1414 = vmatpush1.msra.mxu0 0.0
    %1415 = vmatprep.subr.mxu0 0.0
    %1416 = vmatpush1.msra.mxu0 0.0
    %1417 = vmatprep.subr.mxu0 0.0
    %1418 = vmatpush1.msra.mxu0 0.0
    %1419 = vmatprep.mubr.f32.mxu0 0.0
    %1420 = vmatmul.mubr.f32.gmra.mrb[0].mxu0 %v1353
    %v1421 = vpop.f32.mrb[0].mxu0
    %v1422 = vadd.f32 %v1351, %v1421
    %v1423 = vpop.f32.mrb[0].mxu0
    %1424 = vdwg.mxu0
    %v1425 = vmax.f32 %v1422, 0.0
    %v1426 = vld [vmem:[%s3 + $0x218] sm:$0xff]
    %v1427 = vld [vmem:[%s3 + $0x220] sm:$0xff]
    %v1428 = vld [vmem:[%s3 + $0x236] sm:$0x1]
    %v1429 = vlaneseq
    %v1430 = vshrl.u32 %v1429, 7
    %v1431 = vsub.s32 0, %v1430
    %v1432 = vrot.slane %v1428, %v1431
    %vm1433 = vcmask 130048
    %v1435 = vsel %vm1433, %v1425, 0
    %1437 = vmatprep.subr.mxu0 0.0
    %1438 = vmatpush1.msra.mxu0 %v1426
    %1439 = vmatprep.subr.mxu0 0.0
    %1440 = vmatpush1.msra.mxu0 %v1427
    %1441 = vmatprep.subr.mxu0 0.0
    %1442 = vmatpush1.msra.mxu0 0.0
    %1443 = vmatprep.subr.mxu0 0.0
    %1444 = vmatpush1.msra.mxu0 0.0
    %1445 = vmatprep.subr.mxu0 0.0
    %1446 = vmatpush1.msra.mxu0 0.0
    %1447 = vmatprep.subr.mxu0 0.0
    %1448 = vmatpush1.msra.mxu0 0.0
    %1449 = vmatprep.subr.mxu0 0.0
    %1450 = vmatpush1.msra.mxu0 0.0
    %1451 = vmatprep.subr.mxu0 0.0
    %1452 = vmatpush1.msra.mxu0 0.0
    %1453 = vmatprep.subr.mxu0 0.0
    %1454 = vmatpush1.msra.mxu0 0.0
    %1455 = vmatprep.subr.mxu0 0.0
    %1456 = vmatpush1.msra.mxu0 0.0
    %1457 = vmatprep.subr.mxu0 0.0
    %1458 = vmatpush1.msra.mxu0 0.0
    %1459 = vmatprep.subr.mxu0 0.0
    %1460 = vmatpush1.msra.mxu0 0.0
    %1461 = vmatprep.subr.mxu0 0.0
    %1462 = vmatpush1.msra.mxu0 0.0
    %1463 = vmatprep.subr.mxu0 0.0
    %1464 = vmatpush1.msra.mxu0 0.0
    %1465 = vmatprep.subr.mxu0 0.0
    %1466 = vmatpush1.msra.mxu0 0.0
    %1467 = vmatprep.subr.mxu0 0.0
    %1468 = vmatpush1.msra.mxu0 0.0
    %1469 = vmatprep.subr.mxu0 0.0
    %1470 = vmatpush1.msra.mxu0 0.0
    %1471 = vmatprep.subr.mxu0 0.0
    %1472 = vmatpush1.msra.mxu0 0.0
    %1473 = vmatprep.subr.mxu0 0.0
    %1474 = vmatpush1.msra.mxu0 0.0
    %1475 = vmatprep.subr.mxu0 0.0
    %1476 = vmatpush1.msra.mxu0 0.0
    %1477 = vmatprep.subr.mxu0 0.0
    %1478 = vmatpush1.msra.mxu0 0.0
    %1479 = vmatprep.subr.mxu0 0.0
    %1480 = vmatpush1.msra.mxu0 0.0
    %1481 = vmatprep.subr.mxu0 0.0
    %1482 = vmatpush1.msra.mxu0 0.0
    %1483 = vmatprep.subr.mxu0 0.0
    %1484 = vmatpush1.msra.mxu0 0.0
    %1485 = vmatprep.subr.mxu0 0.0
    %1486 = vmatpush1.msra.mxu0 0.0
    %1487 = vmatprep.subr.mxu0 0.0
    %1488 = vmatpush1.msra.mxu0 0.0
    %1489 = vmatprep.subr.mxu0 0.0
    %1490 = vmatpush1.msra.mxu0 0.0
    %1491 = vmatprep.subr.mxu0 0.0
    %1492 = vmatpush1.msra.mxu0 0.0
    %1493 = vmatprep.subr.mxu0 0.0
    %1494 = vmatpush1.msra.mxu0 0.0
    %1495 = vmatprep.subr.mxu0 0.0
    %1496 = vmatpush1.msra.mxu0 0.0
    %1497 = vmatprep.subr.mxu0 0.0
    %1498 = vmatpush1.msra.mxu0 0.0
    %1499 = vmatprep.subr.mxu0 0.0
    %1500 = vmatpush1.msra.mxu0 0.0
    %1501 = vmatprep.mubr.f32.mxu0 0.0
    %1502 = vmatmul.mubr.f32.gmra.mrb[0].mxu0 %v1435
    %v1503 = vpop.f32.mrb[0].mxu0
    %v1504 = vadd.f32 %v1432, %v1503
    %v1505 = vpop.f32.mrb[0].mxu0
    %1506 = vdwg.mxu0
    %v1507 = vsel %vm282, %v1504, -inf
    %1508 = vmax.xlane.f32.xlu0 %v1507
    %v1509 = vpop.xlane.xlu0 %1508
    %v1510 = vsub.f32 %v1504, %v1509
    %v1511 = vmul.f32 %v1510, 1.442695
    %v1512 = vpow.pop %v1511
    %v1513 = vsel %vm282, %v1512, 0.0
    %1514 = vadd.xlane.f32.xlu0 %v1513
    %v1515 = vpop.xlane.xlu0 %1514
    %v1516 = vrcp.pop %v1515
    %v1517 = vmul.f32 %v1512, %v1516
    %1518 = vst.msk [vmem:[#allocation2] sm:$0xff] %vm282, %v1517
    // Predicated region
    $region18: #{model_portefolio_forward_batched.1} parent=1 // pred_check
      _
    $region19: #{model_portefolio_forward_batched.1} parent=1 // pred_check_branch
      %1520 = sbr.rel (0) target = $region21
    $region20: #{model_portefolio_forward_batched.1} parent=1 // pred_region
      %s1522 = ssub.s32 128, 128
      %1523 = vsyncadd [#allocation3], %s1522
      %s1525 = sshll.u32 [#allocation2], 4
      %s1526 = int_to_ptr.vmem [resolvable:$true] %s1525
      %1528 = dma.vmem_to_hbm [thread:$0]  %s1526, 128, %s4, [#allocation3]
    $region21: #{model_portefolio_forward_batched.1} parent=1 // pred_fallthru
      _
    // Predicated region
    $region22: #{model_portefolio_forward_batched.1} parent=1 // pred_check
      _
    $region23: #{model_portefolio_forward_batched.1} parent=1 // pred_check_branch
      %1530 = sbr.rel (0) target = $region25
    $region24: #{model_portefolio_forward_batched.1} parent=1 // pred_region
      %1531 = dma.done [#allocation3], 128
    $region25: #{model_portefolio_forward_batched.1} parent=1 // pred_fallthru
      _
    %1532 = vsyncpa [#allocation3], 1

</llo_original>
